<compile_context>
chip_gen: v7x
topology: tpu7x:2x2x1
jax: 0.10.0
libtpu: 0.0.40
codegen_flags: <defaults>
</compile_context>

<pallas_src>
import functools
import math

import jax
import jax.numpy as jnp
from jax import lax
from jax.experimental import pallas as pl
from jax.experimental.pallas import tpu as pltpu


def _flash_attn_kernel(q_ref, k_ref, v_ref, o_ref,
                       q_sc, m_sc, l_sc, acc_sc, *,
                       scale, heads, head_dim, kv_len, block_k,
                       compute_dtype, exp_dtype):
    # q_ref/o_ref: (TQ, heads*head_dim); k_ref/v_ref: (TK, heads*head_dim)
    kt = pl.program_id(2)

    @pl.when(kt == 0)
    def _():
        # Hoist the 1/sqrt(D) scaling out of the kt loop; apply it in f32 and
        # only then round to the MXU compute dtype.
        q_sc[...] = (q_ref[...].astype(jnp.float32) * scale).astype(compute_dtype)
        m_sc[...] = jnp.full(m_sc.shape, -jnp.inf, m_sc.dtype)
        l_sc[...] = jnp.zeros(l_sc.shape, l_sc.dtype)
        acc_sc[...] = jnp.zeros(acc_sc.shape, acc_sc.dtype)

    k_all = k_ref[...].astype(compute_dtype)
    v_all = v_ref[...].astype(compute_dtype)

    ragged = (kv_len % block_k) != 0  # static Python bool
    if ragged:
        remaining = kv_len - kt * block_k
        col_valid = lax.broadcasted_iota(jnp.int32, (1, block_k), 1) < remaining
        row_valid = lax.broadcasted_iota(jnp.int32, (block_k, 1), 0) < remaining
        # Zero padded V rows so 0 * garbage cannot produce NaN in the PV matmul.
        v_all = jnp.where(row_valid, v_all, jnp.zeros_like(v_all))

    for h in range(heads):  # static; heads == 1 on the lane-aligned path
        sl = slice(h * head_dim, (h + 1) * head_dim)
        q_h = q_sc[:, sl]
        # QK^T contracting the lane (D) axis of both operands (no k transpose).
        s = lax.dot_general(
            q_h, k_all[:, sl],
            dimension_numbers=(((1,), (1,)), ((), ())),
            preferred_element_type=jnp.float32,
        )  # (TQ, TK) f32
        if ragged:
            s = jnp.where(col_valid, s, -jnp.inf)

        # Online (flash) softmax accumulation across the key axis.
        m_prev = m_sc[h]
        m_new = jnp.maximum(m_prev, jnp.max(s, axis=-1, keepdims=True))
        alpha = jnp.exp(m_prev - m_new)
        p = jnp.exp((s - m_new).astype(exp_dtype))  # bf16 exp on v6e/v7x
        l_sc[h] = alpha * l_sc[h] + jnp.sum(p, axis=-1, keepdims=True,
                                            dtype=jnp.float32)
        acc_sc[h] = alpha * acc_sc[h] + lax.dot_general(
            p.astype(compute_dtype), v_all[:, sl],
            dimension_numbers=(((1,), (0,)), ((), ())),
            preferred_element_type=jnp.float32,
        )
        m_sc[h] = m_new

    @pl.when(kt == pl.num_programs(2) - 1)
    def _():
        for h in range(heads):
            sl = slice(h * head_dim, (h + 1) * head_dim)
            # Exact reciprocal: it is only a (TQ, 1) vector (correctness review).
            inv_l = pl.reciprocal(l_sc[h], approx=False)
            o_ref[:, sl] = (acc_sc[h] * inv_l).astype(o_ref.dtype)


def _device_kind():
    try:
        return jax.devices()[0].device_kind.lower()
    except Exception:
        return ""


def _default_tiles(kind):
    # Per-kt arithmetic intensity ~ TQ flop/byte -> TQ must clear flops/BW.
    if any(g in kind for g in ("v2", "v3", "v4", "v5")):
        return 256, 512   # v5e: 197 TF/s vs 0.82 TB/s -> TQ ~ 240 is balanced
    if "v6" in kind:
        return 768, 512   # v6e: 918 TF/s vs 1.4 TB/s -> TQ >~ 650
    return 512, 512       # v7x / unknown: 3.2 TB/s HBM, 64 MiB VMEM


def _supports_bf16_eup(kind):
    # v6e / v7x have a bf16 EUP; v5e and older do not (keep f32 exp there).
    return not any(g in kind for g in ("v2", "v3", "v4", "v5"))


def _pick_tile(n, target, mult=16):
    # With a cdiv grid + in-kernel masking the tile need not divide n, so we
    # never fall back to the full extent.  Multiples of 16 keep bf16 sublane
    # packing clean.
    if n <= target:
        return n
    return max(mult, (target // mult) * mult)


def attention(Q, K, V, attn_heads, *, q_tile=None, k_tile=None,
              compute_dtype=None):
    """Equivalent of the PyTorch Attention.forward.

    Q: (B, L, C), K: (B, T, C), V: (B, T, C)  ->  (B, L, C)
    """
    B, T, C = K.shape
    L = Q.shape[1]
    H = attn_heads
    assert C % H == 0, "channels must be divisible by attn_heads"
    D = C // H

    kind = _device_kind()
    dq, dk = _default_tiles(kind)
    TQ = _pick_tile(L, q_tile if q_tile is not None else dq)
    TK = _pick_tile(T, k_tile if k_tile is not None else dk)
    nq = pl.cdiv(L, TQ)
    nk = pl.cdiv(T, TK)

    if compute_dtype is None:
        # MXU bf16 rate >> f32 rate on all generations; accumulation stays f32.
        compute_dtype = jnp.bfloat16 if Q.dtype == jnp.float32 else Q.dtype
    exp_dtype = jnp.bfloat16 if _supports_bf16_eup(kind) else jnp.float32

    lane_aligned = (D % 128 == 0)
    heads_per_block = 1 if lane_aligned else H
    c_block = D if lane_aligned else C

    kernel = functools.partial(
        _flash_attn_kernel,
        scale=1.0 / math.sqrt(D),
        heads=heads_per_block,
        head_dim=D,
        kv_len=T,
        block_k=TK,
        compute_dtype=compute_dtype,
        exp_dtype=exp_dtype,
    )

    scratch = [
        pltpu.VMEM((TQ, c_block), compute_dtype),             # pre-scaled q
        pltpu.VMEM((heads_per_block, TQ, 1), jnp.float32),    # running max m
        pltpu.VMEM((heads_per_block, TQ, 1), jnp.float32),    # running denom l
        pltpu.VMEM((heads_per_block, TQ, D), jnp.float32),    # output accumulator
    ]

    in_item = jnp.dtype(Q.dtype).itemsize
    cmp_item = jnp.dtype(compute_dtype).itemsize
    est = (2 * (2 * TQ * c_block + 2 * TK * c_block) * in_item   # q,o,k,v (double-buffered)
           + TQ * c_block * cmp_item                             # q scratch
           + heads_per_block * TQ * (D + 2) * 4                  # acc + m + l
           + 4 * TQ * TK * 4)                                    # s/p f32 temporaries
    vmem_limit = int(min(max(2 * est, 32 << 20), 56 << 20))      # safe on 64 MiB v7x

    compiler_params = pltpu.CompilerParams(
        dimension_semantics=("parallel", "parallel", "arbitrary"),
        vmem_limit_bytes=vmem_limit,
    )

    if lane_aligned:
        # Head selected in the index_map; lane-dense blocks straight out of the
        # (B, S, C) layout, output written lane-dense into (B, L, C).
        grid = (B * H, nq, nk)
        q_spec = pl.BlockSpec((None, TQ, D), lambda bh, qi, ki: (bh // H, qi, bh % H))
        kv_spec = pl.BlockSpec((None, TK, D), lambda bh, qi, ki: (bh // H, ki, bh % H))
        o_spec = pl.BlockSpec((None, TQ, D), lambda bh, qi, ki: (bh // H, qi, bh % H))
    else:
        # D < 128: all heads per grid step (in-kernel head loop), so the HBM
        # blocks stay (TQ, C)/(TK, C) lane-dense and no wrapper transposes are
        # needed.
        grid = (B, nq, nk)
        q_spec = pl.BlockSpec((None, TQ, C), lambda b, qi, ki: (b, qi, 0))
        kv_spec = pl.BlockSpec((None, TK, C), lambda b, qi, ki: (b, ki, 0))
        o_spec = pl.BlockSpec((None, TQ, C), lambda b, qi, ki: (b, qi, 0))

    return pl.pallas_call(
        kernel,
        out_shape=jax.ShapeDtypeStruct((B, L, C), Q.dtype),
        grid_spec=pltpu.PrefetchScalarGridSpec(
            num_scalar_prefetch=0,
            grid=grid,
            in_specs=[q_spec, kv_spec, kv_spec],
            out_specs=o_spec,
            scratch_shapes=scratch,
        ),
        compiler_params=compiler_params,
    )(Q, K, V)


def _attention_ref(Q, K, V, attn_heads):
    """Pure-JAX reference for the correctness check."""
    B, T, C = K.shape
    L = Q.shape[1]
    H = attn_heads
    D = C // H
    q = Q.reshape(B, L, H, D).transpose(0, 2, 1, 3)
    k = K.reshape(B, T, H, D).transpose(0, 2, 1, 3)
    v = V.reshape(B, T, H, D).transpose(0, 2, 1, 3)
    s = jnp.einsum("bhld,bhtd->bhlt", q, k) / math.sqrt(D)
    p = jax.nn.softmax(s, axis=-1)
    o = jnp.einsum("bhlt,bhtd->bhld", p, v)
    return o.transpose(0, 2, 1, 3).reshape(B, L, C)


if __name__ == "__main__":
    # Case 1: module-test-like shapes (D = 8 < 128 -> all-heads-per-step path).
    B, T, L, C, H = 2, 8, 8, 32, 4
    kq, kk, kv = jax.random.split(jax.random.PRNGKey(0), 3)
    Q = jax.random.normal(kq, (B, L, C), dtype=jnp.float32)
    K = jax.random.normal(kk, (B, T, C), dtype=jnp.float32)
    V = jax.random.normal(kv, (B, T, C), dtype=jnp.float32)

    out = jax.block_until_ready(attention(Q, K, V, H))
    ref = _attention_ref(Q, K, V, H)
    assert out.shape == (B, L, C)
    # bf16 matmuls/exp with f32 accumulation -> modest tolerance.
    assert jnp.max(jnp.abs(out - ref)) < 5e-2, "mismatch vs reference (D<128 path)"

    # Case 2: lane-aligned heads (D = 128) exercising the per-head path.
    B2, T2, L2, C2, H2 = 2, 8, 8, 256, 2
    kq2, kk2, kv2 = jax.random.split(jax.random.PRNGKey(1), 3)
    Q2 = jax.random.normal(kq2, (B2, L2, C2), dtype=jnp.float32)
    K2 = jax.random.normal(kk2, (B2, T2, C2), dtype=jnp.float32)
    V2 = jax.random.normal(kv2, (B2, T2, C2), dtype=jnp.float32)

    out2 = jax.block_until_ready(attention(Q2, K2, V2, H2))
    ref2 = _attention_ref(Q2, K2, V2, H2)
    assert out2.shape == (B2, L2, C2)
    assert jnp.max(jnp.abs(out2 - ref2)) < 5e-2, "mismatch vs reference (D>=128 path)"

    print("KERNEL_OK")
</pallas_src>

<mosaic_0001>
module attributes {stable_mosaic.version = 11 : i64} {
  func.func @_flash_attn_kernel(%arg0: i32, %arg1: i32, %arg2: i32, %arg3: memref<1x8x32xf32, #tpu.memory_space<vmem>>, %arg4: memref<1x8x32xf32, #tpu.memory_space<vmem>>, %arg5: memref<1x8x32xf32, #tpu.memory_space<vmem>>, %arg6: memref<1x8x32xf32, #tpu.memory_space<vmem>>, %arg7: memref<8x32xbf16, #tpu.memory_space<vmem>>, %arg8: memref<4x8x1xf32, #tpu.memory_space<vmem>>, %arg9: memref<4x8x1xf32, #tpu.memory_space<vmem>>, %arg10: memref<4x8x8xf32, #tpu.memory_space<vmem>>) attributes {dimension_semantics = [#tpu.dimension_semantics<parallel>, #tpu.dimension_semantics<parallel>, #tpu.dimension_semantics<arbitrary>], iteration_bounds = array<i64: 2, 1, 1>, scalar_prefetch = 0 : i64, scratch_operands = 4 : i64, tpu.core_type = #tpu.core_type<tc>, window_params = [{transform_indices = @transform_0, window_bounds = array<i64: 1, 8, 32>}, {transform_indices = @transform_1, window_bounds = array<i64: 1, 8, 32>}, {transform_indices = @transform_2, window_bounds = array<i64: 1, 8, 32>}, {transform_indices = @transform_3, window_bounds = array<i64: 1, 8, 32>}]} {
    %c0_i32 = arith.constant 0 : i32
    %0 = arith.cmpi eq, %arg2, %c0_i32 : i32
    %1 = arith.extui %0 : i1 to i32
    %c0_i32_0 = arith.constant 0 : i32
    %2 = arith.cmpi ne, %1, %c0_i32_0 : i32
    scf.if %2 {
      %c0_97 = arith.constant 0 : index
      %c0_98 = arith.constant 0 : index
      %c0_99 = arith.constant 0 : index
      %160 = vector.load %arg3[%c0_97, %c0_98, %c0_99] : memref<1x8x32xf32, #tpu.memory_space<vmem>>, vector<1x8x32xf32>
      %161 = vector.shape_cast %160 : vector<1x8x32xf32> to vector<8x32xf32>
      %cst_100 = arith.constant 0.353553385 : f32
      %162 = vector.broadcast %cst_100 : f32 to vector<8x32xf32>
      %163 = arith.mulf %161, %162 : vector<8x32xf32>
      %164 = arith.truncf %163 : vector<8x32xf32> to vector<8x32xbf16>
      %c0_101 = arith.constant 0 : index
      %c0_102 = arith.constant 0 : index
      %165 = vector.load %arg7[%c0_101, %c0_102] : memref<8x32xbf16, #tpu.memory_space<vmem>>, vector<8x32xbf16>
      tpu.vector_store %arg7[%c0_101, %c0_102], %164 {strides = array<i32>} : memref<8x32xbf16, #tpu.memory_space<vmem>>, vector<8x32xbf16>,
      %cst_103 = arith.constant 0xFF800000 : f32
      %166 = vector.broadcast %cst_103 : f32 to vector<4x8x1xf32>
      %c0_104 = arith.constant 0 : index
      %c0_105 = arith.constant 0 : index
      %c0_106 = arith.constant 0 : index
      %167 = vector.load %arg8[%c0_104, %c0_105, %c0_106] : memref<4x8x1xf32, #tpu.memory_space<vmem>>, vector<4x8x1xf32>
      tpu.vector_store %arg8[%c0_104, %c0_105, %c0_106], %166 {strides = array<i32>} : memref<4x8x1xf32, #tpu.memory_space<vmem>>, vector<4x8x1xf32>,
      %cst_107 = arith.constant 0.000000e+00 : f32
      %168 = vector.broadcast %cst_107 : f32 to vector<4x8x1xf32>
      %c0_108 = arith.constant 0 : index
      %c0_109 = arith.constant 0 : index
      %c0_110 = arith.constant 0 : index
      %169 = vector.load %arg9[%c0_108, %c0_109, %c0_110] : memref<4x8x1xf32, #tpu.memory_space<vmem>>, vector<4x8x1xf32>
      tpu.vector_store %arg9[%c0_108, %c0_109, %c0_110], %168 {strides = array<i32>} : memref<4x8x1xf32, #tpu.memory_space<vmem>>, vector<4x8x1xf32>,
      %cst_111 = arith.constant 0.000000e+00 : f32
      %170 = vector.broadcast %cst_111 : f32 to vector<4x8x8xf32>
      %c0_112 = arith.constant 0 : index
      %c0_113 = arith.constant 0 : index
      %c0_114 = arith.constant 0 : index
      %171 = vector.load %arg10[%c0_112, %c0_113, %c0_114] : memref<4x8x8xf32, #tpu.memory_space<vmem>>, vector<4x8x8xf32>
      tpu.vector_store %arg10[%c0_112, %c0_113, %c0_114], %170 {strides = array<i32>} : memref<4x8x8xf32, #tpu.memory_space<vmem>>, vector<4x8x8xf32>,
    } else {
    }
    %c0 = arith.constant 0 : index
    %c0_1 = arith.constant 0 : index
    %c0_2 = arith.constant 0 : index
    %3 = vector.load %arg4[%c0, %c0_1, %c0_2] : memref<1x8x32xf32, #tpu.memory_space<vmem>>, vector<1x8x32xf32>
    %4 = vector.shape_cast %3 : vector<1x8x32xf32> to vector<8x32xf32>
    %5 = arith.truncf %4 : vector<8x32xf32> to vector<8x32xbf16>
    %c0_3 = arith.constant 0 : index
    %c0_4 = arith.constant 0 : index
    %c0_5 = arith.constant 0 : index
    %6 = vector.load %arg5[%c0_3, %c0_4, %c0_5] : memref<1x8x32xf32, #tpu.memory_space<vmem>>, vector<1x8x32xf32>
    %7 = vector.shape_cast %6 : vector<1x8x32xf32> to vector<8x32xf32>
    %8 = arith.truncf %7 : vector<8x32xf32> to vector<8x32xbf16>
    %c0_6 = arith.constant 0 : index
    %c0_7 = arith.constant 0 : index
    %9 = vector.load %arg7[%c0_6, %c0_7] : memref<8x32xbf16, #tpu.memory_space<vmem>>, vector<8x8xbf16>
    %10 = vector.extract_strided_slice %5 {offsets = [0, 0], sizes = [8, 8], strides = [1, 1]} : vector<8x32xbf16> to vector<8x8xbf16>
    %cst = arith.constant dense<0.000000e+00> : vector<8x8xf32>
    %11 = tpu.matmul %9, %10, %cst {dimension_numbers = #tpu.dot_dimension_numbers<[1], [1], [0], [0], [0, 0, 1, 0], [], []>} : vector<8x8xbf16>, vector<8x8xbf16>, vector<8x8xf32> -> vector<8x8xf32>
    %c0_8 = arith.constant 0 : index
    %c0_9 = arith.constant 0 : index
    %c0_10 = arith.constant 0 : index
    %12 = vector.load %arg8[%c0_8, %c0_9, %c0_10] : memref<4x8x1xf32, #tpu.memory_space<vmem>>, vector<1x8x1xf32>
    %13 = vector.shape_cast %12 : vector<1x8x1xf32> to vector<8x1xf32>
    %cst_11 = arith.constant dense<0xFF800000> : vector<8xf32>
    %14 = vector.multi_reduction <maximumf>, %11, %cst_11 [1] : vector<8x8xf32> to vector<8xf32>
    %15 = vector.shape_cast %14 : vector<8xf32> to vector<8x1xf32>
    %16 = arith.maximumf %13, %15 : vector<8x1xf32>
    %17 = arith.subf %13, %16 : vector<8x1xf32>
    %18 = math.exp %17 : vector<8x1xf32>
    %19 = vector.broadcast %16 : vector<8x1xf32> to vector<8x8xf32>
    %20 = arith.subf %11, %19 : vector<8x8xf32>
    %21 = arith.truncf %20 : vector<8x8xf32> to vector<8x8xbf16>
    %22 = math.exp %21 : vector<8x8xbf16>
    %c0_12 = arith.constant 0 : index
    %c0_13 = arith.constant 0 : index
    %c0_14 = arith.constant 0 : index
    %23 = vector.load %arg9[%c0_12, %c0_13, %c0_14] : memref<4x8x1xf32, #tpu.memory_space<vmem>>, vector<1x8x1xf32>
    %24 = vector.shape_cast %23 : vector<1x8x1xf32> to vector<8x1xf32>
    %25 = arith.mulf %18, %24 : vector<8x1xf32>
    %26 = arith.extf %22 : vector<8x8xbf16> to vector<8x8xf32>
    %cst_15 = arith.constant dense<0.000000e+00> : vector<8xf32>
    %27 = vector.multi_reduction <add>, %26, %cst_15 [1] : vector<8x8xf32> to vector<8xf32>
    %28 = vector.shape_cast %27 : vector<8xf32> to vector<8x1xf32>
    %29 = arith.addf %25, %28 : vector<8x1xf32>
    %c0_16 = arith.constant 0 : index
    %c0_17 = arith.constant 0 : index
    %c0_18 = arith.constant 0 : index
    %30 = vector.load %arg9[%c0_16, %c0_17, %c0_18] : memref<4x8x1xf32, #tpu.memory_space<vmem>>, vector<1x8x1xf32>
    %31 = vector.shape_cast %30 : vector<1x8x1xf32> to vector<8x1xf32>
    %32 = vector.shape_cast %29 : vector<8x1xf32> to vector<1x8x1xf32>
    tpu.vector_store %arg9[%c0_16, %c0_17, %c0_18], %32 {strides = array<i32>} : memref<4x8x1xf32, #tpu.memory_space<vmem>>, vector<1x8x1xf32>,
    %c0_19 = arith.constant 0 : index
    %c0_20 = arith.constant 0 : index
    %c0_21 = arith.constant 0 : index
    %33 = vector.load %arg10[%c0_19, %c0_20, %c0_21] : memref<4x8x8xf32, #tpu.memory_space<vmem>>, vector<1x8x8xf32>
    %34 = vector.shape_cast %33 : vector<1x8x8xf32> to vector<8x8xf32>
    %35 = vector.broadcast %18 : vector<8x1xf32> to vector<8x8xf32>
    %36 = arith.mulf %35, %34 : vector<8x8xf32>
    %37 = vector.extract_strided_slice %8 {offsets = [0, 0], sizes = [8, 8], strides = [1, 1]} : vector<8x32xbf16> to vector<8x8xbf16>
    %cst_22 = arith.constant dense<0.000000e+00> : vector<8x8xf32>
    %38 = tpu.matmul %22, %37, %cst_22 {dimension_numbers = #tpu.dot_dimension_numbers<[1], [0], [0], [1], [0, 0, 1, 1], [], []>} : vector<8x8xbf16>, vector<8x8xbf16>, vector<8x8xf32> -> vector<8x8xf32>
    %39 = arith.addf %36, %38 : vector<8x8xf32>
    %c0_23 = arith.constant 0 : index
    %c0_24 = arith.constant 0 : index
    %c0_25 = arith.constant 0 : index
    %40 = vector.load %arg10[%c0_23, %c0_24, %c0_25] : memref<4x8x8xf32, #tpu.memory_space<vmem>>, vector<1x8x8xf32>
    %41 = vector.shape_cast %40 : vector<1x8x8xf32> to vector<8x8xf32>
    %42 = vector.shape_cast %39 : vector<8x8xf32> to vector<1x8x8xf32>
    tpu.vector_store %arg10[%c0_23, %c0_24, %c0_25], %42 {strides = array<i32>} : memref<4x8x8xf32, #tpu.memory_space<vmem>>, vector<1x8x8xf32>,
    %c0_26 = arith.constant 0 : index
    %c0_27 = arith.constant 0 : index
    %c0_28 = arith.constant 0 : index
    %43 = vector.load %arg8[%c0_26, %c0_27, %c0_28] : memref<4x8x1xf32, #tpu.memory_space<vmem>>, vector<1x8x1xf32>
    %44 = vector.shape_cast %43 : vector<1x8x1xf32> to vector<8x1xf32>
    %45 = vector.shape_cast %16 : vector<8x1xf32> to vector<1x8x1xf32>
    tpu.vector_store %arg8[%c0_26, %c0_27, %c0_28], %45 {strides = array<i32>} : memref<4x8x1xf32, #tpu.memory_space<vmem>>, vector<1x8x1xf32>,
    %c0_29 = arith.constant 0 : index
    %c8 = arith.constant 8 : index
    %46 = vector.load %arg7[%c0_29, %c8] : memref<8x32xbf16, #tpu.memory_space<vmem>>, vector<8x8xbf16>
    %47 = vector.extract_strided_slice %5 {offsets = [0, 8], sizes = [8, 8], strides = [1, 1]} : vector<8x32xbf16> to vector<8x8xbf16>
    %cst_30 = arith.constant dense<0.000000e+00> : vector<8x8xf32>
    %48 = tpu.matmul %46, %47, %cst_30 {dimension_numbers = #tpu.dot_dimension_numbers<[1], [1], [0], [0], [0, 0, 1, 0], [], []>} : vector<8x8xbf16>, vector<8x8xbf16>, vector<8x8xf32> -> vector<8x8xf32>
    %c1 = arith.constant 1 : index
    %c0_31 = arith.constant 0 : index
    %c0_32 = arith.constant 0 : index
    %49 = vector.load %arg8[%c1, %c0_31, %c0_32] : memref<4x8x1xf32, #tpu.memory_space<vmem>>, vector<1x8x1xf32>
    %50 = vector.shape_cast %49 : vector<1x8x1xf32> to vector<8x1xf32>
    %cst_33 = arith.constant dense<0xFF800000> : vector<8xf32>
    %51 = vector.multi_reduction <maximumf>, %48, %cst_33 [1] : vector<8x8xf32> to vector<8xf32>
    %52 = vector.shape_cast %51 : vector<8xf32> to vector<8x1xf32>
    %53 = arith.maximumf %50, %52 : vector<8x1xf32>
    %54 = arith.subf %50, %53 : vector<8x1xf32>
    %55 = math.exp %54 : vector<8x1xf32>
    %56 = vector.broadcast %53 : vector<8x1xf32> to vector<8x8xf32>
    %57 = arith.subf %48, %56 : vector<8x8xf32>
    %58 = arith.truncf %57 : vector<8x8xf32> to vector<8x8xbf16>
    %59 = math.exp %58 : vector<8x8xbf16>
    %c1_34 = arith.constant 1 : index
    %c0_35 = arith.constant 0 : index
    %c0_36 = arith.constant 0 : index
    %60 = vector.load %arg9[%c1_34, %c0_35, %c0_36] : memref<4x8x1xf32, #tpu.memory_space<vmem>>, vector<1x8x1xf32>
    %61 = vector.shape_cast %60 : vector<1x8x1xf32> to vector<8x1xf32>
    %62 = arith.mulf %55, %61 : vector<8x1xf32>
    %63 = arith.extf %59 : vector<8x8xbf16> to vector<8x8xf32>
    %cst_37 = arith.constant dense<0.000000e+00> : vector<8xf32>
    %64 = vector.multi_reduction <add>, %63, %cst_37 [1] : vector<8x8xf32> to vector<8xf32>
    %65 = vector.shape_cast %64 : vector<8xf32> to vector<8x1xf32>
    %66 = arith.addf %62, %65 : vector<8x1xf32>
    %c1_38 = arith.constant 1 : index
    %c0_39 = arith.constant 0 : index
    %c0_40 = arith.constant 0 : index
    %67 = vector.load %arg9[%c1_38, %c0_39, %c0_40] : memref<4x8x1xf32, #tpu.memory_space<vmem>>, vector<1x8x1xf32>
    %68 = vector.shape_cast %67 : vector<1x8x1xf32> to vector<8x1xf32>
    %69 = vector.shape_cast %66 : vector<8x1xf32> to vector<1x8x1xf32>
    tpu.vector_store %arg9[%c1_38, %c0_39, %c0_40], %69 {strides = array<i32>} : memref<4x8x1xf32, #tpu.memory_space<vmem>>, vector<1x8x1xf32>,
    %c1_41 = arith.constant 1 : index
    %c0_42 = arith.constant 0 : index
    %c0_43 = arith.constant 0 : index
    %70 = vector.load %arg10[%c1_41, %c0_42, %c0_43] : memref<4x8x8xf32, #tpu.memory_space<vmem>>, vector<1x8x8xf32>
    %71 = vector.shape_cast %70 : vector<1x8x8xf32> to vector<8x8xf32>
    %72 = vector.broadcast %55 : vector<8x1xf32> to vector<8x8xf32>
    %73 = arith.mulf %72, %71 : vector<8x8xf32>
    %74 = vector.extract_strided_slice %8 {offsets = [0, 8], sizes = [8, 8], strides = [1, 1]} : vector<8x32xbf16> to vector<8x8xbf16>
    %cst_44 = arith.constant dense<0.000000e+00> : vector<8x8xf32>
    %75 = tpu.matmul %59, %74, %cst_44 {dimension_numbers = #tpu.dot_dimension_numbers<[1], [0], [0], [1], [0, 0, 1, 1], [], []>} : vector<8x8xbf16>, vector<8x8xbf16>, vector<8x8xf32> -> vector<8x8xf32>
    %76 = arith.addf %73, %75 : vector<8x8xf32>
    %c1_45 = arith.constant 1 : index
    %c0_46 = arith.constant 0 : index
    %c0_47 = arith.constant 0 : index
    %77 = vector.load %arg10[%c1_45, %c0_46, %c0_47] : memref<4x8x8xf32, #tpu.memory_space<vmem>>, vector<1x8x8xf32>
    %78 = vector.shape_cast %77 : vector<1x8x8xf32> to vector<8x8xf32>
    %79 = vector.shape_cast %76 : vector<8x8xf32> to vector<1x8x8xf32>
    tpu.vector_store %arg10[%c1_45, %c0_46, %c0_47], %79 {strides = array<i32>} : memref<4x8x8xf32, #tpu.memory_space<vmem>>, vector<1x8x8xf32>,
    %c1_48 = arith.constant 1 : index
    %c0_49 = arith.constant 0 : index
    %c0_50 = arith.constant 0 : index
    %80 = vector.load %arg8[%c1_48, %c0_49, %c0_50] : memref<4x8x1xf32, #tpu.memory_space<vmem>>, vector<1x8x1xf32>
    %81 = vector.shape_cast %80 : vector<1x8x1xf32> to vector<8x1xf32>
    %82 = vector.shape_cast %53 : vector<8x1xf32> to vector<1x8x1xf32>
    tpu.vector_store %arg8[%c1_48, %c0_49, %c0_50], %82 {strides = array<i32>} : memref<4x8x1xf32, #tpu.memory_space<vmem>>, vector<1x8x1xf32>,
    %c0_51 = arith.constant 0 : index
    %c16 = arith.constant 16 : index
    %83 = vector.load %arg7[%c0_51, %c16] : memref<8x32xbf16, #tpu.memory_space<vmem>>, vector<8x8xbf16>
    %84 = vector.extract_strided_slice %5 {offsets = [0, 16], sizes = [8, 8], strides = [1, 1]} : vector<8x32xbf16> to vector<8x8xbf16>
    %cst_52 = arith.constant dense<0.000000e+00> : vector<8x8xf32>
    %85 = tpu.matmul %83, %84, %cst_52 {dimension_numbers = #tpu.dot_dimension_numbers<[1], [1], [0], [0], [0, 0, 1, 0], [], []>} : vector<8x8xbf16>, vector<8x8xbf16>, vector<8x8xf32> -> vector<8x8xf32>
    %c2 = arith.constant 2 : index
    %c0_53 = arith.constant 0 : index
    %c0_54 = arith.constant 0 : index
    %86 = vector.load %arg8[%c2, %c0_53, %c0_54] : memref<4x8x1xf32, #tpu.memory_space<vmem>>, vector<1x8x1xf32>
    %87 = vector.shape_cast %86 : vector<1x8x1xf32> to vector<8x1xf32>
    %cst_55 = arith.constant dense<0xFF800000> : vector<8xf32>
    %88 = vector.multi_reduction <maximumf>, %85, %cst_55 [1] : vector<8x8xf32> to vector<8xf32>
    %89 = vector.shape_cast %88 : vector<8xf32> to vector<8x1xf32>
    %90 = arith.maximumf %87, %89 : vector<8x1xf32>
    %91 = arith.subf %87, %90 : vector<8x1xf32>
    %92 = math.exp %91 : vector<8x1xf32>
    %93 = vector.broadcast %90 : vector<8x1xf32> to vector<8x8xf32>
    %94 = arith.subf %85, %93 : vector<8x8xf32>
    %95 = arith.truncf %94 : vector<8x8xf32> to vector<8x8xbf16>
    %96 = math.exp %95 : vector<8x8xbf16>
    %c2_56 = arith.constant 2 : index
    %c0_57 = arith.constant 0 : index
    %c0_58 = arith.constant 0 : index
    %97 = vector.load %arg9[%c2_56, %c0_57, %c0_58] : memref<4x8x1xf32, #tpu.memory_space<vmem>>, vector<1x8x1xf32>
    %98 = vector.shape_cast %97 : vector<1x8x1xf32> to vector<8x1xf32>
    %99 = arith.mulf %92, %98 : vector<8x1xf32>
    %100 = arith.extf %96 : vector<8x8xbf16> to vector<8x8xf32>
    %cst_59 = arith.constant dense<0.000000e+00> : vector<8xf32>
    %101 = vector.multi_reduction <add>, %100, %cst_59 [1] : vector<8x8xf32> to vector<8xf32>
    %102 = vector.shape_cast %101 : vector<8xf32> to vector<8x1xf32>
    %103 = arith.addf %99, %102 : vector<8x1xf32>
    %c2_60 = arith.constant 2 : index
    %c0_61 = arith.constant 0 : index
    %c0_62 = arith.constant 0 : index
    %104 = vector.load %arg9[%c2_60, %c0_61, %c0_62] : memref<4x8x1xf32, #tpu.memory_space<vmem>>, vector<1x8x1xf32>
    %105 = vector.shape_cast %104 : vector<1x8x1xf32> to vector<8x1xf32>
    %106 = vector.shape_cast %103 : vector<8x1xf32> to vector<1x8x1xf32>
    tpu.vector_store %arg9[%c2_60, %c0_61, %c0_62], %106 {strides = array<i32>} : memref<4x8x1xf32, #tpu.memory_space<vmem>>, vector<1x8x1xf32>,
    %c2_63 = arith.constant 2 : index
    %c0_64 = arith.constant 0 : index
    %c0_65 = arith.constant 0 : index
    %107 = vector.load %arg10[%c2_63, %c0_64, %c0_65] : memref<4x8x8xf32, #tpu.memory_space<vmem>>, vector<1x8x8xf32>
    %108 = vector.shape_cast %107 : vector<1x8x8xf32> to vector<8x8xf32>
    %109 = vector.broadcast %92 : vector<8x1xf32> to vector<8x8xf32>
    %110 = arith.mulf %109, %108 : vector<8x8xf32>
    %111 = vector.extract_strided_slice %8 {offsets = [0, 16], sizes = [8, 8], strides = [1, 1]} : vector<8x32xbf16> to vector<8x8xbf16>
    %cst_66 = arith.constant dense<0.000000e+00> : vector<8x8xf32>
    %112 = tpu.matmul %96, %111, %cst_66 {dimension_numbers = #tpu.dot_dimension_numbers<[1], [0], [0], [1], [0, 0, 1, 1], [], []>} : vector<8x8xbf16>, vector<8x8xbf16>, vector<8x8xf32> -> vector<8x8xf32>
    %113 = arith.addf %110, %112 : vector<8x8xf32>
    %c2_67 = arith.constant 2 : index
    %c0_68 = arith.constant 0 : index
    %c0_69 = arith.constant 0 : index
    %114 = vector.load %arg10[%c2_67, %c0_68, %c0_69] : memref<4x8x8xf32, #tpu.memory_space<vmem>>, vector<1x8x8xf32>
    %115 = vector.shape_cast %114 : vector<1x8x8xf32> to vector<8x8xf32>
    %116 = vector.shape_cast %113 : vector<8x8xf32> to vector<1x8x8xf32>
    tpu.vector_store %arg10[%c2_67, %c0_68, %c0_69], %116 {strides = array<i32>} : memref<4x8x8xf32, #tpu.memory_space<vmem>>, vector<1x8x8xf32>,
    %c2_70 = arith.constant 2 : index
    %c0_71 = arith.constant 0 : index
    %c0_72 = arith.constant 0 : index
    %117 = vector.load %arg8[%c2_70, %c0_71, %c0_72] : memref<4x8x1xf32, #tpu.memory_space<vmem>>, vector<1x8x1xf32>
    %118 = vector.shape_cast %117 : vector<1x8x1xf32> to vector<8x1xf32>
    %119 = vector.shape_cast %90 : vector<8x1xf32> to vector<1x8x1xf32>
    tpu.vector_store %arg8[%c2_70, %c0_71, %c0_72], %119 {strides = array<i32>} : memref<4x8x1xf32, #tpu.memory_space<vmem>>, vector<1x8x1xf32>,
    %c0_73 = arith.constant 0 : index
    %c24 = arith.constant 24 : index
    %120 = vector.load %arg7[%c0_73, %c24] : memref<8x32xbf16, #tpu.memory_space<vmem>>, vector<8x8xbf16>
    %121 = vector.extract_strided_slice %5 {offsets = [0, 24], sizes = [8, 8], strides = [1, 1]} : vector<8x32xbf16> to vector<8x8xbf16>
    %cst_74 = arith.constant dense<0.000000e+00> : vector<8x8xf32>
    %122 = tpu.matmul %120, %121, %cst_74 {dimension_numbers = #tpu.dot_dimension_numbers<[1], [1], [0], [0], [0, 0, 1, 0], [], []>} : vector<8x8xbf16>, vector<8x8xbf16>, vector<8x8xf32> -> vector<8x8xf32>
    %c3 = arith.constant 3 : index
    %c0_75 = arith.constant 0 : index
    %c0_76 = arith.constant 0 : index
    %123 = vector.load %arg8[%c3, %c0_75, %c0_76] : memref<4x8x1xf32, #tpu.memory_space<vmem>>, vector<1x8x1xf32>
    %124 = vector.shape_cast %123 : vector<1x8x1xf32> to vector<8x1xf32>
    %cst_77 = arith.constant dense<0xFF800000> : vector<8xf32>
    %125 = vector.multi_reduction <maximumf>, %122, %cst_77 [1] : vector<8x8xf32> to vector<8xf32>
    %126 = vector.shape_cast %125 : vector<8xf32> to vector<8x1xf32>
    %127 = arith.maximumf %124, %126 : vector<8x1xf32>
    %128 = arith.subf %124, %127 : vector<8x1xf32>
    %129 = math.exp %128 : vector<8x1xf32>
    %130 = vector.broadcast %127 : vector<8x1xf32> to vector<8x8xf32>
    %131 = arith.subf %122, %130 : vector<8x8xf32>
    %132 = arith.truncf %131 : vector<8x8xf32> to vector<8x8xbf16>
    %133 = math.exp %132 : vector<8x8xbf16>
    %c3_78 = arith.constant 3 : index
    %c0_79 = arith.constant 0 : index
    %c0_80 = arith.constant 0 : index
    %134 = vector.load %arg9[%c3_78, %c0_79, %c0_80] : memref<4x8x1xf32, #tpu.memory_space<vmem>>, vector<1x8x1xf32>
    %135 = vector.shape_cast %134 : vector<1x8x1xf32> to vector<8x1xf32>
    %136 = arith.mulf %129, %135 : vector<8x1xf32>
    %137 = arith.extf %133 : vector<8x8xbf16> to vector<8x8xf32>
    %cst_81 = arith.constant dense<0.000000e+00> : vector<8xf32>
    %138 = vector.multi_reduction <add>, %137, %cst_81 [1] : vector<8x8xf32> to vector<8xf32>
    %139 = vector.shape_cast %138 : vector<8xf32> to vector<8x1xf32>
    %140 = arith.addf %136, %139 : vector<8x1xf32>
    %c3_82 = arith.constant 3 : index
    %c0_83 = arith.constant 0 : index
    %c0_84 = arith.constant 0 : index
    %141 = vector.load %arg9[%c3_82, %c0_83, %c0_84] : memref<4x8x1xf32, #tpu.memory_space<vmem>>, vector<1x8x1xf32>
    %142 = vector.shape_cast %141 : vector<1x8x1xf32> to vector<8x1xf32>
    %143 = vector.shape_cast %140 : vector<8x1xf32> to vector<1x8x1xf32>
    tpu.vector_store %arg9[%c3_82, %c0_83, %c0_84], %143 {strides = array<i32>} : memref<4x8x1xf32, #tpu.memory_space<vmem>>, vector<1x8x1xf32>,
    %c3_85 = arith.constant 3 : index
    %c0_86 = arith.constant 0 : index
    %c0_87 = arith.constant 0 : index
    %144 = vector.load %arg10[%c3_85, %c0_86, %c0_87] : memref<4x8x8xf32, #tpu.memory_space<vmem>>, vector<1x8x8xf32>
    %145 = vector.shape_cast %144 : vector<1x8x8xf32> to vector<8x8xf32>
    %146 = vector.broadcast %129 : vector<8x1xf32> to vector<8x8xf32>
    %147 = arith.mulf %146, %145 : vector<8x8xf32>
    %148 = vector.extract_strided_slice %8 {offsets = [0, 24], sizes = [8, 8], strides = [1, 1]} : vector<8x32xbf16> to vector<8x8xbf16>
    %cst_88 = arith.constant dense<0.000000e+00> : vector<8x8xf32>
    %149 = tpu.matmul %133, %148, %cst_88 {dimension_numbers = #tpu.dot_dimension_numbers<[1], [0], [0], [1], [0, 0, 1, 1], [], []>} : vector<8x8xbf16>, vector<8x8xbf16>, vector<8x8xf32> -> vector<8x8xf32>
    %150 = arith.addf %147, %149 : vector<8x8xf32>
    %c3_89 = arith.constant 3 : index
    %c0_90 = arith.constant 0 : index
    %c0_91 = arith.constant 0 : index
    %151 = vector.load %arg10[%c3_89, %c0_90, %c0_91] : memref<4x8x8xf32, #tpu.memory_space<vmem>>, vector<1x8x8xf32>
    %152 = vector.shape_cast %151 : vector<1x8x8xf32> to vector<8x8xf32>
    %153 = vector.shape_cast %150 : vector<8x8xf32> to vector<1x8x8xf32>
    tpu.vector_store %arg10[%c3_89, %c0_90, %c0_91], %153 {strides = array<i32>} : memref<4x8x8xf32, #tpu.memory_space<vmem>>, vector<1x8x8xf32>,
    %c3_92 = arith.constant 3 : index
    %c0_93 = arith.constant 0 : index
    %c0_94 = arith.constant 0 : index
    %154 = vector.load %arg8[%c3_92, %c0_93, %c0_94] : memref<4x8x1xf32, #tpu.memory_space<vmem>>, vector<1x8x1xf32>
    %155 = vector.shape_cast %154 : vector<1x8x1xf32> to vector<8x1xf32>
    %156 = vector.shape_cast %127 : vector<8x1xf32> to vector<1x8x1xf32>
    tpu.vector_store %arg8[%c3_92, %c0_93, %c0_94], %156 {strides = array<i32>} : memref<4x8x1xf32, #tpu.memory_space<vmem>>, vector<1x8x1xf32>,
    %c0_i32_95 = arith.constant 0 : i32
    %157 = arith.cmpi eq, %arg2, %c0_i32_95 : i32
    %158 = arith.extui %157 : i1 to i32
    %c0_i32_96 = arith.constant 0 : i32
    %159 = arith.cmpi ne, %158, %c0_i32_96 : i32
    scf.if %159 {
      %c0_97 = arith.constant 0 : index
      %c0_98 = arith.constant 0 : index
      %c0_99 = arith.constant 0 : index
      %160 = vector.load %arg9[%c0_97, %c0_98, %c0_99] : memref<4x8x1xf32, #tpu.memory_space<vmem>>, vector<1x8x1xf32>
      %161 = vector.shape_cast %160 : vector<1x8x1xf32> to vector<8x1xf32>
      %162 = tpu.reciprocal %161 : vector<8x1xf32> -> vector<8x1xf32>
      %c0_100 = arith.constant 0 : index
      %c0_101 = arith.constant 0 : index
      %c0_102 = arith.constant 0 : index
      %163 = vector.load %arg10[%c0_100, %c0_101, %c0_102] : memref<4x8x8xf32, #tpu.memory_space<vmem>>, vector<1x8x8xf32>
      %164 = vector.shape_cast %163 : vector<1x8x8xf32> to vector<8x8xf32>
      %165 = vector.broadcast %162 : vector<8x1xf32> to vector<8x8xf32>
      %166 = arith.mulf %164, %165 : vector<8x8xf32>
      %c0_103 = arith.constant 0 : index
      %c0_104 = arith.constant 0 : index
      %c0_105 = arith.constant 0 : index
      %167 = vector.load %arg6[%c0_103, %c0_104, %c0_105] : memref<1x8x32xf32, #tpu.memory_space<vmem>>, vector<1x8x8xf32>
      %168 = vector.shape_cast %167 : vector<1x8x8xf32> to vector<8x8xf32>
      %169 = vector.shape_cast %166 : vector<8x8xf32> to vector<1x8x8xf32>
      tpu.vector_store %arg6[%c0_103, %c0_104, %c0_105], %169 {strides = array<i32>} : memref<1x8x32xf32, #tpu.memory_space<vmem>>, vector<1x8x8xf32>,
      %c1_106 = arith.constant 1 : index
      %c0_107 = arith.constant 0 : index
      %c0_108 = arith.constant 0 : index
      %170 = vector.load %arg9[%c1_106, %c0_107, %c0_108] : memref<4x8x1xf32, #tpu.memory_space<vmem>>, vector<1x8x1xf32>
      %171 = vector.shape_cast %170 : vector<1x8x1xf32> to vector<8x1xf32>
      %172 = tpu.reciprocal %171 : vector<8x1xf32> -> vector<8x1xf32>
      %c1_109 = arith.constant 1 : index
      %c0_110 = arith.constant 0 : index
      %c0_111 = arith.constant 0 : index
      %173 = vector.load %arg10[%c1_109, %c0_110, %c0_111] : memref<4x8x8xf32, #tpu.memory_space<vmem>>, vector<1x8x8xf32>
      %174 = vector.shape_cast %173 : vector<1x8x8xf32> to vector<8x8xf32>
      %175 = vector.broadcast %172 : vector<8x1xf32> to vector<8x8xf32>
      %176 = arith.mulf %174, %175 : vector<8x8xf32>
      %c0_112 = arith.constant 0 : index
      %c0_113 = arith.constant 0 : index
      %c8_114 = arith.constant 8 : index
      %177 = vector.load %arg6[%c0_112, %c0_113, %c8_114] : memref<1x8x32xf32, #tpu.memory_space<vmem>>, vector<1x8x8xf32>
      %178 = vector.shape_cast %177 : vector<1x8x8xf32> to vector<8x8xf32>
      %179 = vector.shape_cast %176 : vector<8x8xf32> to vector<1x8x8xf32>
      tpu.vector_store %arg6[%c0_112, %c0_113, %c8_114], %179 {strides = array<i32>} : memref<1x8x32xf32, #tpu.memory_space<vmem>>, vector<1x8x8xf32>,
      %c2_115 = arith.constant 2 : index
      %c0_116 = arith.constant 0 : index
      %c0_117 = arith.constant 0 : index
      %180 = vector.load %arg9[%c2_115, %c0_116, %c0_117] : memref<4x8x1xf32, #tpu.memory_space<vmem>>, vector<1x8x1xf32>
      %181 = vector.shape_cast %180 : vector<1x8x1xf32> to vector<8x1xf32>
      %182 = tpu.reciprocal %181 : vector<8x1xf32> -> vector<8x1xf32>
      %c2_118 = arith.constant 2 : index
      %c0_119 = arith.constant 0 : index
      %c0_120 = arith.constant 0 : index
      %183 = vector.load %arg10[%c2_118, %c0_119, %c0_120] : memref<4x8x8xf32, #tpu.memory_space<vmem>>, vector<1x8x8xf32>
      %184 = vector.shape_cast %183 : vector<1x8x8xf32> to vector<8x8xf32>
      %185 = vector.broadcast %182 : vector<8x1xf32> to vector<8x8xf32>
      %186 = arith.mulf %184, %185 : vector<8x8xf32>
      %c0_121 = arith.constant 0 : index
      %c0_122 = arith.constant 0 : index
      %c16_123 = arith.constant 16 : index
      %187 = vector.load %arg6[%c0_121, %c0_122, %c16_123] : memref<1x8x32xf32, #tpu.memory_space<vmem>>, vector<1x8x8xf32>
      %188 = vector.shape_cast %187 : vector<1x8x8xf32> to vector<8x8xf32>
      %189 = vector.shape_cast %186 : vector<8x8xf32> to vector<1x8x8xf32>
      tpu.vector_store %arg6[%c0_121, %c0_122, %c16_123], %189 {strides = array<i32>} : memref<1x8x32xf32, #tpu.memory_space<vmem>>, vector<1x8x8xf32>,
      %c3_124 = arith.constant 3 : index
      %c0_125 = arith.constant 0 : index
      %c0_126 = arith.constant 0 : index
      %190 = vector.load %arg9[%c3_124, %c0_125, %c0_126] : memref<4x8x1xf32, #tpu.memory_space<vmem>>, vector<1x8x1xf32>
      %191 = vector.shape_cast %190 : vector<1x8x1xf32> to vector<8x1xf32>
      %192 = tpu.reciprocal %191 : vector<8x1xf32> -> vector<8x1xf32>
      %c3_127 = arith.constant 3 : index
      %c0_128 = arith.constant 0 : index
      %c0_129 = arith.constant 0 : index
      %193 = vector.load %arg10[%c3_127, %c0_128, %c0_129] : memref<4x8x8xf32, #tpu.memory_space<vmem>>, vector<1x8x8xf32>
      %194 = vector.shape_cast %193 : vector<1x8x8xf32> to vector<8x8xf32>
      %195 = vector.broadcast %192 : vector<8x1xf32> to vector<8x8xf32>
      %196 = arith.mulf %194, %195 : vector<8x8xf32>
      %c0_130 = arith.constant 0 : index
      %c0_131 = arith.constant 0 : index
      %c24_132 = arith.constant 24 : index
      %197 = vector.load %arg6[%c0_130, %c0_131, %c24_132] : memref<1x8x32xf32, #tpu.memory_space<vmem>>, vector<1x8x8xf32>
      %198 = vector.shape_cast %197 : vector<1x8x8xf32> to vector<8x8xf32>
      %199 = vector.shape_cast %196 : vector<8x8xf32> to vector<1x8x8xf32>
      tpu.vector_store %arg6[%c0_130, %c0_131, %c24_132], %199 {strides = array<i32>} : memref<1x8x32xf32, #tpu.memory_space<vmem>>, vector<1x8x8xf32>,
    } else {
    }
    return
  }
  func.func @transform_0(%arg0: i32, %arg1: i32, %arg2: i32) -> (i32, i32, i32) {
    %c0_i32 = arith.constant 0 : i32
    %c0_i32_0 = arith.constant 0 : i32
    return %arg0, %arg1, %c0_i32 : i32, i32, i32
  }
  func.func @transform_1(%arg0: i32, %arg1: i32, %arg2: i32) -> (i32, i32, i32) {
    %c0_i32 = arith.constant 0 : i32
    %c0_i32_0 = arith.constant 0 : i32
    return %arg0, %arg2, %c0_i32 : i32, i32, i32
  }
  func.func @transform_2(%arg0: i32, %arg1: i32, %arg2: i32) -> (i32, i32, i32) {
    %c0_i32 = arith.constant 0 : i32
    %c0_i32_0 = arith.constant 0 : i32
    return %arg0, %arg2, %c0_i32 : i32, i32, i32
  }
  func.func @transform_3(%arg0: i32, %arg1: i32, %arg2: i32) -> (i32, i32, i32) {
    %c0_i32 = arith.constant 0 : i32
    %c0_i32_0 = arith.constant 0 : i32
    return %arg0, %arg1, %c0_i32 : i32, i32, i32
  }
}

</mosaic_0001>

<llo_original>
// kernel: tpu_custom_call.1
$region0: #{tpu_custom_call.1}
  #allocation0 [shape = 'u32[]', space=smem, size = 0x4, offset = 0x4, fixed_abs, tag = 'smem constant byte address 0x4 - core index']
  #allocation1 [shape = 'u32[144,128]{1,0:T(1,128)}', space=vmem, size = 0x12000, scoped, tag = 'internal scratch']
  #allocation2 [shape = 'bf16[8,32]{1,0:T(8,128)(2,1)}', space=vmem, size = 0x800, scoped, tag = 'scratch operand']
  #allocation3 [shape = 'f32[4,8,1]{2,1,0:T(8,128)}', space=vmem, size = 0x4000, scoped, tag = 'scratch operand']
  #allocation4 [shape = 'f32[4,8,1]{2,1,0:T(8,128)}', space=vmem, size = 0x4000, scoped, tag = 'scratch operand']
  #allocation5 [shape = 'f32[4,8,8]{2,1,0:T(8,128)}', space=vmem, size = 0x4000, scoped, tag = 'scratch operand']
  %s0 = inlined_call_operand.hbm [shape: f32[2,8,32], index: 0, kind: input, shape index: {}]
  %s1 = inlined_call_operand.hbm [shape: f32[2,8,32], index: 1, kind: input, shape index: {}]
  %s2 = inlined_call_operand.hbm [shape: f32[2,8,32], index: 2, kind: input, shape index: {}]
  %s3 = inlined_call_operand.hbm [shape: f32[2,8,32], index: 3, kind: output, shape index: {}]
  %s4 = sld [smem:[#allocation0]]
  $region65: #{tpu_custom_call.1} parent=0
    _
  %s6 = ssub.s32 1, %s4
  %s7 = scalar_select 0, %s6, %s4
  $region1: #{tpu_custom_call.1} parent=0
    #allocation6 [shape = 'u8[8192]{0}', space=vmem, size = 0x2000, scoped, tag = 'input window, operand 0']
    #allocation7 [shape = 's32[2]{0}', space=sflag, size = 0x8, scoped, tag = 'scoped memory for tpu_custom_call.1']
    #allocation8 [shape = 's32[2]{0}', space=sflag, size = 0x8, scoped, tag = 'scoped memory for tpu_custom_call.1']
    #allocation9 [shape = 'u8[8192]{0}', space=vmem, size = 0x2000, scoped, tag = 'input window, operand 1']
    #allocation10 [shape = 's32[2]{0}', space=sflag, size = 0x8, scoped, tag = 'scoped memory for tpu_custom_call.1']
    #allocation11 [shape = 'u8[8192]{0}', space=vmem, size = 0x2000, scoped, tag = 'input window, operand 2']
    #allocation12 [shape = 'u8[8192]{0}', space=vmem, size = 0x2000, scoped, tag = 'output window, operand 0']
    %8 = vsyncpa [#allocation7], 0
    %s9 = scalar_lea.sflag [#allocation7], 1
    %10 = vsyncpa %s9, 0
    %11 = vsyncpa [#allocation10], 0
    %s12 = scalar_lea.sflag [#allocation10], 1
    %13 = vsyncpa %s12, 0
    %14 = vsyncpa [#allocation8], 0
    %s15 = scalar_lea.sflag [#allocation8], 1
    %16 = vsyncpa %s15, 0
    loop: start=0, step=1, limit=4
    $region2: #{tpu_custom_call.1} parent=1 // loop_pre_header
      _
    $region3: #{tpu_custom_call.1} parent=1 // loop_header
      %s18 = sphi 0, %s22
      %p19 = scmp.ge.s32.totalorder %s18, 4
      %s25 = sphi 0, %s44
      %s26 = sphi 0, %s40
      %s27 = sphi 0, %s36
      %s28 = sphi 0, %s25
      %s29 = sphi 0, %s26
      %s30 = sphi 0, %s27
      %s31 = sphi 0, %s28
      %s32 = sphi 0, %s29
      %s33 = sphi 0, %s30
      %s49 = sphi 0, %s51
      %s52 = sphi 0, %s49
      %s53 = sphi 0, %s52
      %s69 = sphi 0, %s53
      %s77 = sphi 0, %s79
      %s80 = sphi 0, %s77
      %s81 = sphi 0, %s80
      %s97 = sphi 0, %s81
      %s105 = sphi 0, %s107
      %s108 = sphi 0, %s105
      %s109 = sphi 0, %s108
      %s125 = sphi 0, %s109
      %s133 = sphi 0, %s135
      %s136 = sphi 0, %s133
      %s137 = sphi 0, %s136
      %s153 = sphi 0, %s137
    $region4: #{tpu_custom_call.1} parent=1 // loop_header_branch
      %21 = sbr.rel (%p19) target = $region8
    $region5: #{tpu_custom_call.1} parent=1 // loop_body
      %s23 = ssub.s32 %s18, 1
      %s24 = ssub.s32 %s18, 2
      %s34 = sadd.s32 1, %s27
      %p35 = scmp.ge.s32.totalorder %s34, 1
      %s36 = scalar_select %p35, 0, %s34
      %s37 = sadd.s32 1, %s26
      %s38 = scalar_select %p35, %s37, %s26
      %p39 = scmp.ge.s32.totalorder %s38, 1
      %s40 = scalar_select %p39, 0, %s38
      %s41 = sadd.s32 1, %s25
      %s42 = scalar_select %p39, %s41, %s25
      %p43 = scmp.ge.s32.totalorder %s42, 2
      %s44 = scalar_select %p43, 0, %s42
      %s45 = ssub.s32 %s25, %s44
      %s46 = ssub.s32 %s26, %s40
      %s47 = sor.u32 %s45, %s46
      %p48 = scmp.eq.s32.totalorder %s47, 0
      %s50 = sadd.s32 %s49, 1
      %s51 = scalar_select %p48, %s49, %s50
      %p54 = pneg %p48
      %p55 = scmp.eq.s32.totalorder %s18, 1
      %p56 = por %p54, %p55
      %p57 = scmp.ne.s32.totalorder %s49, %s52
      %p58 = scmp.eq.s32.totalorder %s18, 0
      %p59 = por %p57, %p58
      %p60 = scmp.ne.s32.totalorder %s49, %s52
      %p61 = scmp.eq.s32.totalorder %s23, 1
      %p62 = por %p60, %p61
      %p63 = scmp.ne.s32.totalorder %s52, %s53
      %p64 = scmp.eq.s32.totalorder %s23, 0
      %p65 = por %p63, %p64
      %p66 = scmp.ne.s32.totalorder %s52, %s53
      %p67 = scmp.eq.s32.totalorder %s24, 1
      %p68 = por %p66, %p67
      %p70 = scmp.ne.s32.totalorder %s53, %s69
      %p71 = scmp.eq.s32.totalorder %s24, 0
      %p72 = por %p70, %p71
      %s73 = ssub.s32 %s25, %s44
      %s74 = ssub.s32 %s27, %s36
      %s75 = sor.u32 %s73, %s74
      %p76 = scmp.eq.s32.totalorder %s75, 0
      %s78 = sadd.s32 %s77, 1
      %s79 = scalar_select %p76, %s77, %s78
      %p82 = pneg %p76
      %p83 = scmp.eq.s32.totalorder %s18, 1
      %p84 = por %p82, %p83
      %p85 = scmp.ne.s32.totalorder %s77, %s80
      %p86 = scmp.eq.s32.totalorder %s18, 0
      %p87 = por %p85, %p86
      %p88 = scmp.ne.s32.totalorder %s77, %s80
      %p89 = scmp.eq.s32.totalorder %s23, 1
      %p90 = por %p88, %p89
      %p91 = scmp.ne.s32.totalorder %s80, %s81
      %p92 = scmp.eq.s32.totalorder %s23, 0
      %p93 = por %p91, %p92
      %p94 = scmp.ne.s32.totalorder %s80, %s81
      %p95 = scmp.eq.s32.totalorder %s24, 1
      %p96 = por %p94, %p95
      %p98 = scmp.ne.s32.totalorder %s81, %s97
      %p99 = scmp.eq.s32.totalorder %s24, 0
      %p100 = por %p98, %p99
      %s101 = ssub.s32 %s25, %s44
      %s102 = ssub.s32 %s27, %s36
      %s103 = sor.u32 %s101, %s102
      %p104 = scmp.eq.s32.totalorder %s103, 0
      %s106 = sadd.s32 %s105, 1
      %s107 = scalar_select %p104, %s105, %s106
      %p110 = pneg %p104
      %p111 = scmp.eq.s32.totalorder %s18, 1
      %p112 = por %p110, %p111
      %p113 = scmp.ne.s32.totalorder %s105, %s108
      %p114 = scmp.eq.s32.totalorder %s18, 0
      %p115 = por %p113, %p114
      %p116 = scmp.ne.s32.totalorder %s105, %s108
      %p117 = scmp.eq.s32.totalorder %s23, 1
      %p118 = por %p116, %p117
      %p119 = scmp.ne.s32.totalorder %s108, %s109
      %p120 = scmp.eq.s32.totalorder %s23, 0
      %p121 = por %p119, %p120
      %p122 = scmp.ne.s32.totalorder %s108, %s109
      %p123 = scmp.eq.s32.totalorder %s24, 1
      %p124 = por %p122, %p123
      %p126 = scmp.ne.s32.totalorder %s109, %s125
      %p127 = scmp.eq.s32.totalorder %s24, 0
      %p128 = por %p126, %p127
      %s129 = ssub.s32 %s25, %s44
      %s130 = ssub.s32 %s26, %s40
      %s131 = sor.u32 %s129, %s130
      %p132 = scmp.eq.s32.totalorder %s131, 0
      %s134 = sadd.s32 %s133, 1
      %s135 = scalar_select %p132, %s133, %s134
      %p138 = pneg %p132
      %p139 = scmp.eq.s32.totalorder %s18, 1
      %p140 = por %p138, %p139
      %p141 = scmp.ne.s32.totalorder %s133, %s136
      %p142 = scmp.eq.s32.totalorder %s18, 0
      %p143 = por %p141, %p142
      %p144 = scmp.ne.s32.totalorder %s133, %s136
      %p145 = scmp.eq.s32.totalorder %s23, 1
      %p146 = por %p144, %p145
      %p147 = scmp.ne.s32.totalorder %s136, %s137
      %p148 = scmp.eq.s32.totalorder %s23, 0
      %p149 = por %p147, %p148
      %p150 = scmp.ne.s32.totalorder %s136, %s137
      %p151 = scmp.eq.s32.totalorder %s24, 1
      %p152 = por %p150, %p151
      %p154 = scmp.ne.s32.totalorder %s137, %s153
      %p155 = scmp.eq.s32.totalorder %s24, 0
      %p156 = por %p154, %p155
      %p157 = scmp.le.s32.totalorder 1, %s18
      %p158 = scmp.lt.s32.totalorder %s18, 3
      %p159 = pnand %p157, %p158
      %p160 = pneg %p159
      // Predicated region
      $region9: #{tpu_custom_call.1} parent=5 // pred_check
        _
      $region10: #{tpu_custom_call.1} parent=5 // pred_check_branch
        %162 = sbr.rel (%p159) target = $region12
      $region11: #{tpu_custom_call.1} parent=5 // pred_region
        %s163 = ssub.s32 %s18, 1
      $region12: #{tpu_custom_call.1} parent=5 // pred_fallthru
        _
      %p164 = scmp.lt.s32.totalorder %s18, 2
      // Predicated region
      $region13: #{tpu_custom_call.1} parent=5 // pred_check
        %p165 = pneg %p164
      $region14: #{tpu_custom_call.1} parent=5 // pred_check_branch
        %167 = sbr.rel (%p165) target = $region16
      $region15: #{tpu_custom_call.1} parent=5 // pred_region
        // Predicated region
        $region17: #{tpu_custom_call.1} parent=15 // pred_check
          %p168 = pneg %p59
        $region18: #{tpu_custom_call.1} parent=15 // pred_check_branch
          %170 = sbr.rel (%p168) target = $region20
        $region19: #{tpu_custom_call.1} parent=15 // pred_region
          %s171 = sand.u32 %s49, 1
          %s172 = scalar_lea.sflag [#allocation7], %s171
          %s173 = sand.u32 %s49, 1
          %s174 = smul.addr %s173, 8
          %s175 = scalar_lea.vmem [#allocation6], %s174
          %s177 = ssub.s32 128, 128
          %178 = vsyncadd %s172, %s177
          %s179 = sadd.s32 %s26, %s25
          %s180 = smul.addr %s179, 128
          %s181 = scalar_lea.hbm %s0, %s180
          %s183 = sshll.u32 %s175, 4
          %s184 = int_to_ptr.vmem [resolvable:$true] %s183
          %186 = dma.hbm_to_vmem [thread:$0]  %s181, 128, %s184, %s172
        $region20: #{tpu_custom_call.1} parent=15 // pred_fallthru
          _
        // Predicated region
        $region21: #{tpu_custom_call.1} parent=15 // pred_check
          %p187 = pneg %p87
        $region22: #{tpu_custom_call.1} parent=15 // pred_check_branch
          %189 = sbr.rel (%p187) target = $region24
        $region23: #{tpu_custom_call.1} parent=15 // pred_region
          %s190 = sand.u32 %s18, 1
          %s191 = scalar_lea.sflag [#allocation10], %s190
          %s192 = sand.u32 %s77, 1
          %s193 = smul.addr %s192, 8
          %s194 = scalar_lea.vmem [#allocation9], %s193
          %s196 = ssub.s32 128, 128
          %197 = vsyncadd %s191, %s196
          %s198 = sadd.s32 %s27, %s25
          %s199 = smul.addr %s198, 128
          %s200 = scalar_lea.hbm %s1, %s199
          %s202 = sshll.u32 %s194, 4
          %s203 = int_to_ptr.vmem [resolvable:$true] %s202
          %205 = dma.hbm_to_vmem [thread:$0]  %s200, 128, %s203, %s191
        $region24: #{tpu_custom_call.1} parent=15 // pred_fallthru
          _
        // Predicated region
        $region25: #{tpu_custom_call.1} parent=15 // pred_check
          %p206 = pneg %p115
        $region26: #{tpu_custom_call.1} parent=15 // pred_check_branch
          %208 = sbr.rel (%p206) target = $region28
        $region27: #{tpu_custom_call.1} parent=15 // pred_region
          %s209 = sand.u32 %s18, 1
          %s210 = scalar_lea.sflag [#allocation10], %s209
          %s211 = sand.u32 %s105, 1
          %s212 = smul.addr %s211, 8
          %s213 = scalar_lea.vmem [#allocation11], %s212
          %s215 = ssub.s32 128, 128
          %216 = vsyncadd %s210, %s215
          %s217 = sadd.s32 %s27, %s25
          %s218 = smul.addr %s217, 128
          %s219 = scalar_lea.hbm %s2, %s218
          %s221 = sshll.u32 %s213, 4
          %s222 = int_to_ptr.vmem [resolvable:$true] %s221
          %224 = dma.hbm_to_vmem [thread:$0]  %s219, 128, %s222, %s210
        $region28: #{tpu_custom_call.1} parent=15 // pred_fallthru
          _
      $region16: #{tpu_custom_call.1} parent=5 // pred_fallthru
        _
      %p225 = scmp.le.s32.totalorder 1, %s18
      %p226 = scmp.lt.s32.totalorder %s18, 3
      %p227 = pnand %p225, %p226
      %p228 = pneg %p227
      // Predicated region
      $region29: #{tpu_custom_call.1} parent=5 // pred_check
        _
      $region30: #{tpu_custom_call.1} parent=5 // pred_check_branch
        %230 = sbr.rel (%p227) target = $region32
      $region31: #{tpu_custom_call.1} parent=5 // pred_region
        %s231 = ssub.s32 %s18, 1
        %s232 = sand.u32 %s52, 1
        %s233 = scalar_lea.sflag [#allocation7], %s232
        %s234 = sand.u32 %s52, 1
        %s235 = smul.addr %s234, 8
        %s236 = scalar_lea.vmem [#allocation6], %s235
        // Predicated region
        $region33: #{tpu_custom_call.1} parent=31 // pred_check
          %p237 = pneg %p65
        $region34: #{tpu_custom_call.1} parent=31 // pred_check_branch
          %239 = sbr.rel (%p237) target = $region36
        $region35: #{tpu_custom_call.1} parent=31 // pred_region
          %240 = dma.done %s233, 128
        $region36: #{tpu_custom_call.1} parent=31 // pred_fallthru
          _
        %s241 = sand.u32 %s23, 1
        %s242 = scalar_lea.sflag [#allocation10], %s241
        %s243 = sand.u32 %s80, 1
        %s244 = smul.addr %s243, 8
        %s245 = scalar_lea.vmem [#allocation9], %s244
        // Predicated region
        $region37: #{tpu_custom_call.1} parent=31 // pred_check
          %p246 = pneg %p93
        $region38: #{tpu_custom_call.1} parent=31 // pred_check_branch
          %248 = sbr.rel (%p246) target = $region40
        $region39: #{tpu_custom_call.1} parent=31 // pred_region
          %249 = dma.done %s242, 128
        $region40: #{tpu_custom_call.1} parent=31 // pred_fallthru
          _
        %s250 = sand.u32 %s23, 1
        %s251 = scalar_lea.sflag [#allocation10], %s250
        %s252 = sand.u32 %s108, 1
        %s253 = smul.addr %s252, 8
        %s254 = scalar_lea.vmem [#allocation11], %s253
        // Predicated region
        $region41: #{tpu_custom_call.1} parent=31 // pred_check
          %p255 = pneg %p121
        $region42: #{tpu_custom_call.1} parent=31 // pred_check_branch
          %257 = sbr.rel (%p255) target = $region44
        $region43: #{tpu_custom_call.1} parent=31 // pred_region
          %258 = dma.done %s251, 128
        $region44: #{tpu_custom_call.1} parent=31 // pred_fallthru
          _
        %s259 = sand.u32 %s52, 1
        %s260 = scalar_lea.sflag [#allocation7], %s259
        %s261 = sand.u32 %s52, 1
        %s262 = smul.addr %s261, 8
        %s263 = scalar_lea.vmem [#allocation6], %s262
        %p264 = pneg %p65
        %p265 = pneg %p62
        %s266 = sand.u32 %s23, 1
        %s267 = scalar_lea.sflag [#allocation10], %s266
        %s268 = sand.u32 %s80, 1
        %s269 = smul.addr %s268, 8
        %s270 = scalar_lea.vmem [#allocation9], %s269
        %p271 = pneg %p93
        %p272 = pneg %p90
        %s273 = sand.u32 %s23, 1
        %s274 = scalar_lea.sflag [#allocation10], %s273
        %s275 = sand.u32 %s108, 1
        %s276 = smul.addr %s275, 8
        %s277 = scalar_lea.vmem [#allocation11], %s276
        %p278 = pneg %p121
        %p279 = pneg %p118
        %p280 = pneg %p149
        %p281 = pneg %p146
        %s282 = sand.u32 %s136, 1
        %s283 = scalar_lea.sflag [#allocation8], %s282
        %s284 = sand.u32 %s136, 1
        %s285 = smul.addr %s284, 8
        %s286 = scalar_lea.vmem [#allocation12], %s285
        %p288 = scmp.eq.s32.totalorder %s30, 0
        // Predicated region
        $region45: #{tpu_custom_call.1} parent=31 // pred_check
          %p289 = pneg %p288
        $region46: #{tpu_custom_call.1} parent=31 // pred_check_branch
          %291 = sbr.rel (%p289) target = $region48
        $region47: #{tpu_custom_call.1} parent=31 // pred_region
          %v292 = vld [vmem:[%s236] sm:$0xff]
          %v293 = vmul.f32 %v292, 0.35355338
          %v294 = vpack.c.bf16 %v293, %v293
          %vm295 = vcmask 257024
          %296 = vst.msk [vmem:[#allocation2] sm:$0xf] %vm295, %v294
          %vm297 = vcmask 7168
          %298 = vst.msk [vmem:[#allocation3] sm:$0xff] %vm297, -inf
          %299 = vst.msk [vmem:[#allocation3 + $0x8] sm:$0xff] %vm297, -inf
          %300 = vst.msk [vmem:[#allocation3 + $0x10] sm:$0xff] %vm297, -inf
          %301 = vst.msk [vmem:[#allocation3 + $0x18] sm:$0xff] %vm297, -inf
          %302 = vst.msk [vmem:[#allocation4] sm:$0xff] %vm297, 0.0
          %303 = vst.msk [vmem:[#allocation4 + $0x8] sm:$0xff] %vm297, 0.0
          %304 = vst.msk [vmem:[#allocation4 + $0x10] sm:$0xff] %vm297, 0.0
          %305 = vst.msk [vmem:[#allocation4 + $0x18] sm:$0xff] %vm297, 0.0
          %vm306 = vcmask 64512
          %307 = vst.msk [vmem:[#allocation5] sm:$0xff] %vm306, 0.0
          %308 = vst.msk [vmem:[#allocation5 + $0x8] sm:$0xff] %vm306, 0.0
          %309 = vst.msk [vmem:[#allocation5 + $0x10] sm:$0xff] %vm306, 0.0
          %310 = vst.msk [vmem:[#allocation5 + $0x18] sm:$0xff] %vm306, 0.0
        $region48: #{tpu_custom_call.1} parent=31 // pred_fallthru
          _
        %v311 = vld [vmem:[%s245] sm:$0xff]
        %v312 = vpack.c.bf16 %v311, %v311
        %v313 = vld [vmem:[%s254] sm:$0xff]
        %v314 = vpack.c.bf16 %v313, %v313
        %v315 = vld [vmem:[#allocation2] sm:$0xf]
        %vm316 = vcmask 64512
        %v318 = vsel %vm316, %v315, 0
        %v321 = vsel %vm316, %v312, 0
        %323 = vmatprep.subr.bf16.mxu0 0
        %324 = vmatpush1.bf16.xpose.msra.mxu0 %v321
        %325 = vmatprep.subr.bf16.mxu0 0
        %326 = vmatpush1.bf16.xpose.msra.mxu0 0
        %327 = vmatprep.subr.bf16.mxu0 0
        %328 = vmatpush1.bf16.xpose.msra.mxu0 0
        %329 = vmatprep.subr.bf16.mxu0 0
        %330 = vmatpush1.bf16.xpose.msra.mxu0 0
        %331 = vmatprep.subr.bf16.mxu0 0
        %332 = vmatpush1.bf16.xpose.msra.mxu0 0
        %333 = vmatprep.subr.bf16.mxu0 0
        %334 = vmatpush1.bf16.xpose.msra.mxu0 0
        %335 = vmatprep.subr.bf16.mxu0 0
        %336 = vmatpush1.bf16.xpose.msra.mxu0 0
        %337 = vmatprep.subr.bf16.mxu0 0
        %338 = vmatpush1.bf16.xpose.msra.mxu0 0
        %339 = vmatprep.subr.bf16.mxu0 0
        %340 = vmatpush1.bf16.xpose.msra.mxu0 0
        %341 = vmatprep.subr.bf16.mxu0 0
        %342 = vmatpush1.bf16.xpose.msra.mxu0 0
        %343 = vmatprep.subr.bf16.mxu0 0
        %344 = vmatpush1.bf16.xpose.msra.mxu0 0
        %345 = vmatprep.subr.bf16.mxu0 0
        %346 = vmatpush1.bf16.xpose.msra.mxu0 0
        %347 = vmatprep.subr.bf16.mxu0 0
        %348 = vmatpush1.bf16.xpose.msra.mxu0 0
        %349 = vmatprep.subr.bf16.mxu0 0
        %350 = vmatpush1.bf16.xpose.msra.mxu0 0
        %351 = vmatprep.subr.bf16.mxu0 0
        %352 = vmatpush1.bf16.xpose.msra.mxu0 0
        %353 = vmatprep.subr.bf16.mxu0 0
        %354 = vmatpush1.bf16.xpose.msra.mxu0 0
        %355 = vmatprep.mubr.bf16.mxu0 0
        %356 = vmatmul.mubr.bf16.gmra.mrb[0].mxu0 %v318
        %v357 = vpop.f32.mrb[0].mxu0
        %v358 = vadd.f32 0.0, %v357
        %v359 = vpop.f32.mrb[0].mxu0
        %v360 = vpop.f32.mrb[0].mxu0
        %v361 = vpop.f32.mrb[0].mxu0
        %362 = vdwg.mxu0
        %v363 = vld [vmem:[#allocation3] sm:$0xff]
        %v364 = vsel %vm316, %v358, -inf
        %365 = vmax.xlane.f32.xlu0 %v364
        %v366 = vpop.xlane.xlu0 %365
        %v367 = vmax.f32 %v363, %v366
        %v368 = vsub.f32 %v363, %v367
        %v369 = vmul.f32 %v368, 1.442695
        %v370 = vpow.pop %v369
        %372 = vset.pattern.permute.xlu0 0
        %373 = vperm.xlu0 %372, %v367
        %v374 = vpop.permute.xlu0 %373
        %v376 = vsub.f32 %v358, %v374
        %v377 = vpack.c.bf16 %v376, %v376
        %v379 = vmul.bf16 %v377, 1069105081
        %v380 = vpow.bf16.pop %v379
        %v381 = vld [vmem:[#allocation4] sm:$0xff]
        %v382 = vmul.f32 %v370, %v381
        %v383 = vunpack.c.l.bf16 %v380
        %v384 = vsel %vm316, %v383, 0.0
        %385 = vadd.xlane.f32.xlu0 %v384
        %v386 = vpop.xlane.xlu0 %385
        %v387 = vadd.f32 %v382, %v386
        %vm388 = vcmask 7168
        %389 = vst.msk [vmem:[#allocation4] sm:$0xff] %vm388, %v387
        %v390 = vld [vmem:[#allocation5] sm:$0xff]
        %392 = vset.pattern.permute.xlu0 0
        %393 = vperm.xlu0 %392, %v370
        %v394 = vpop.permute.xlu0 %393
        %v396 = vmul.f32 %v394, %v390
        %v398 = vsel %vm316, %v380, 0
        %vm400 = vcmask 1043456
        %v402 = vsel %vm400, %v314, 0
        %404 = vmatprep.subr.bf16.mxu0 0
        %405 = vmatpush1.bf16.msra.mxu0 %v402
        %406 = vmatprep.subr.bf16.mxu0 0
        %407 = vmatpush1.bf16.msra.mxu0 0
        %408 = vmatprep.subr.bf16.mxu0 0
        %409 = vmatpush1.bf16.msra.mxu0 0
        %410 = vmatprep.subr.bf16.mxu0 0
        %411 = vmatpush1.bf16.msra.mxu0 0
        %412 = vmatprep.subr.bf16.mxu0 0
        %413 = vmatpush1.bf16.msra.mxu0 0
        %414 = vmatprep.subr.bf16.mxu0 0
        %415 = vmatpush1.bf16.msra.mxu0 0
        %416 = vmatprep.subr.bf16.mxu0 0
        %417 = vmatpush1.bf16.msra.mxu0 0
        %418 = vmatprep.subr.bf16.mxu0 0
        %419 = vmatpush1.bf16.msra.mxu0 0
        %420 = vmatprep.subr.bf16.mxu0 0
        %421 = vmatpush1.bf16.msra.mxu0 0
        %422 = vmatprep.subr.bf16.mxu0 0
        %423 = vmatpush1.bf16.msra.mxu0 0
        %424 = vmatprep.subr.bf16.mxu0 0
        %425 = vmatpush1.bf16.msra.mxu0 0
        %426 = vmatprep.subr.bf16.mxu0 0
        %427 = vmatpush1.bf16.msra.mxu0 0
        %428 = vmatprep.subr.bf16.mxu0 0
        %429 = vmatpush1.bf16.msra.mxu0 0
        %430 = vmatprep.subr.bf16.mxu0 0
        %431 = vmatpush1.bf16.msra.mxu0 0
        %432 = vmatprep.subr.bf16.mxu0 0
        %433 = vmatpush1.bf16.msra.mxu0 0
        %434 = vmatprep.subr.bf16.mxu0 0
        %435 = vmatpush1.bf16.msra.mxu0 0
        %436 = vmatprep.mubr.bf16.mxu0 0
        %437 = vmatmul.mubr.bf16.gmra.mrb[0].mxu0 %v398
        %v438 = vpop.f32.mrb[0].mxu0
        %v439 = vadd.f32 0.0, %v438
        %v440 = vpop.f32.mrb[0].mxu0
        %v441 = vpop.f32.mrb[0].mxu0
        %v442 = vpop.f32.mrb[0].mxu0
        %443 = vdwg.mxu0
        %v444 = vadd.f32 %v396, %v439
        %445 = vst.msk [vmem:[#allocation5] sm:$0xff] %vm316, %v444
        %446 = vst.msk [vmem:[#allocation3] sm:$0xff] %vm388, %v367
        %v447 = vld [vmem:[#allocation2] sm:$0xf]
        %v449 = vunpack.c.l.b16 %v447
        %v450 = vpack.c.b16 %v449, %v449
        %451 = vrot.lane.b32.xlu0 %v450, 120
        %v452 = vpop.permute.xlu0 %451
        %454 = vrot.lane.b32.xlu0 %v312, 120
        %v455 = vpop.permute.xlu0 %454
        %v457 = vsel %vm316, %v452, 0
        %v460 = vsel %vm316, %v455, 0
        %462 = vmatprep.subr.bf16.mxu0 0
        %463 = vmatpush1.bf16.xpose.msra.mxu0 %v460
        %464 = vmatprep.subr.bf16.mxu0 0
        %465 = vmatpush1.bf16.xpose.msra.mxu0 0
        %466 = vmatprep.subr.bf16.mxu0 0
        %467 = vmatpush1.bf16.xpose.msra.mxu0 0
        %468 = vmatprep.subr.bf16.mxu0 0
        %469 = vmatpush1.bf16.xpose.msra.mxu0 0
        %470 = vmatprep.subr.bf16.mxu0 0
        %471 = vmatpush1.bf16.xpose.msra.mxu0 0
        %472 = vmatprep.subr.bf16.mxu0 0
        %473 = vmatpush1.bf16.xpose.msra.mxu0 0
        %474 = vmatprep.subr.bf16.mxu0 0
        %475 = vmatpush1.bf16.xpose.msra.mxu0 0
        %476 = vmatprep.subr.bf16.mxu0 0
        %477 = vmatpush1.bf16.xpose.msra.mxu0 0
        %478 = vmatprep.subr.bf16.mxu0 0
        %479 = vmatpush1.bf16.xpose.msra.mxu0 0
        %480 = vmatprep.subr.bf16.mxu0 0
        %481 = vmatpush1.bf16.xpose.msra.mxu0 0
        %482 = vmatprep.subr.bf16.mxu0 0
        %483 = vmatpush1.bf16.xpose.msra.mxu0 0
        %484 = vmatprep.subr.bf16.mxu0 0
        %485 = vmatpush1.bf16.xpose.msra.mxu0 0
        %486 = vmatprep.subr.bf16.mxu0 0
        %487 = vmatpush1.bf16.xpose.msra.mxu0 0
        %488 = vmatprep.subr.bf16.mxu0 0
        %489 = vmatpush1.bf16.xpose.msra.mxu0 0
        %490 = vmatprep.subr.bf16.mxu0 0
        %491 = vmatpush1.bf16.xpose.msra.mxu0 0
        %492 = vmatprep.subr.bf16.mxu0 0
        %493 = vmatpush1.bf16.xpose.msra.mxu0 0
        %494 = vmatprep.mubr.bf16.mxu0 0
        %495 = vmatmul.mubr.bf16.gmra.mrb[0].mxu0 %v457
        %v496 = vpop.f32.mrb[0].mxu0
        %v497 = vadd.f32 0.0, %v496
        %v498 = vpop.f32.mrb[0].mxu0
        %v499 = vpop.f32.mrb[0].mxu0
        %v500 = vpop.f32.mrb[0].mxu0
        %501 = vdwg.mxu0
        %s502 = scalar_lea.vmem [#allocation3], 8
        %v503 = vld [vmem:[%s502] sm:$0xff]
        %v504 = vsel %vm316, %v497, -inf
        %505 = vmax.xlane.f32.xlu0 %v504
        %v506 = vpop.xlane.xlu0 %505
        %v507 = vmax.f32 %v503, %v506
        %v508 = vsub.f32 %v503, %v507
        %v509 = vmul.f32 %v508, 1.442695
        %v510 = vpow.pop %v509
        %512 = vset.pattern.permute.xlu0 0
        %513 = vperm.xlu0 %512, %v507
        %v514 = vpop.permute.xlu0 %513
        %v516 = vsub.f32 %v497, %v514
        %v517 = vpack.c.bf16 %v516, %v516
        %v519 = vmul.bf16 %v517, 1069105081
        %v520 = vpow.bf16.pop %v519
        %s521 = scalar_lea.vmem [#allocation4], 8
        %v522 = vld [vmem:[%s521] sm:$0xff]
        %v523 = vmul.f32 %v510, %v522
        %v524 = vunpack.c.l.bf16 %v520
        %v525 = vsel %vm316, %v524, 0.0
        %526 = vadd.xlane.f32.xlu0 %v525
        %v527 = vpop.xlane.xlu0 %526
        %v528 = vadd.f32 %v523, %v527
        %529 = vst.msk [vmem:[%s521] sm:$0xff] %vm388, %v528
        %s530 = scalar_lea.vmem [#allocation5], 8
        %v531 = vld [vmem:[%s530] sm:$0xff]
        %533 = vset.pattern.permute.xlu0 0
        %534 = vperm.xlu0 %533, %v510
        %v535 = vpop.permute.xlu0 %534
        %v537 = vmul.f32 %v535, %v531
        %539 = vrot.lane.b32.xlu0 %v314, 120
        %v540 = vpop.permute.xlu0 %539
        %v542 = vsel %vm316, %v520, 0
        %v545 = vsel %vm400, %v540, 0
        %547 = vmatprep.subr.bf16.mxu0 0
        %548 = vmatpush1.bf16.msra.mxu0 %v545
        %549 = vmatprep.subr.bf16.mxu0 0
        %550 = vmatpush1.bf16.msra.mxu0 0
        %551 = vmatprep.subr.bf16.mxu0 0
        %552 = vmatpush1.bf16.msra.mxu0 0
        %553 = vmatprep.subr.bf16.mxu0 0
        %554 = vmatpush1.bf16.msra.mxu0 0
        %555 = vmatprep.subr.bf16.mxu0 0
        %556 = vmatpush1.bf16.msra.mxu0 0
        %557 = vmatprep.subr.bf16.mxu0 0
        %558 = vmatpush1.bf16.msra.mxu0 0
        %559 = vmatprep.subr.bf16.mxu0 0
        %560 = vmatpush1.bf16.msra.mxu0 0
        %561 = vmatprep.subr.bf16.mxu0 0
        %562 = vmatpush1.bf16.msra.mxu0 0
        %563 = vmatprep.subr.bf16.mxu0 0
        %564 = vmatpush1.bf16.msra.mxu0 0
        %565 = vmatprep.subr.bf16.mxu0 0
        %566 = vmatpush1.bf16.msra.mxu0 0
        %567 = vmatprep.subr.bf16.mxu0 0
        %568 = vmatpush1.bf16.msra.mxu0 0
        %569 = vmatprep.subr.bf16.mxu0 0
        %570 = vmatpush1.bf16.msra.mxu0 0
        %571 = vmatprep.subr.bf16.mxu0 0
        %572 = vmatpush1.bf16.msra.mxu0 0
        %573 = vmatprep.subr.bf16.mxu0 0
        %574 = vmatpush1.bf16.msra.mxu0 0
        %575 = vmatprep.subr.bf16.mxu0 0
        %576 = vmatpush1.bf16.msra.mxu0 0
        %577 = vmatprep.subr.bf16.mxu0 0
        %578 = vmatpush1.bf16.msra.mxu0 0
        %579 = vmatprep.mubr.bf16.mxu0 0
        %580 = vmatmul.mubr.bf16.gmra.mrb[0].mxu0 %v542
        %v581 = vpop.f32.mrb[0].mxu0
        %v582 = vadd.f32 0.0, %v581
        %v583 = vpop.f32.mrb[0].mxu0
        %v584 = vpop.f32.mrb[0].mxu0
        %v585 = vpop.f32.mrb[0].mxu0
        %586 = vdwg.mxu0
        %v587 = vadd.f32 %v537, %v582
        %588 = vst.msk [vmem:[%s530] sm:$0xff] %vm316, %v587
        %589 = vst.msk [vmem:[%s502] sm:$0xff] %vm388, %v507
        %v590 = vld [vmem:[#allocation2] sm:$0xf]
        %v592 = vunpack.c.l.b16 %v590
        %v593 = vpack.c.b16 %v592, %v592
        %594 = vrot.lane.b32.xlu0 %v593, 112
        %v595 = vpop.permute.xlu0 %594
        %596 = vrot.lane.b32.xlu0 %v312, 112
        %v597 = vpop.permute.xlu0 %596
        %v599 = vsel %vm316, %v595, 0
        %v602 = vsel %vm316, %v597, 0
        %604 = vmatprep.subr.bf16.mxu0 0
        %605 = vmatpush1.bf16.xpose.msra.mxu0 %v602
        %606 = vmatprep.subr.bf16.mxu0 0
        %607 = vmatpush1.bf16.xpose.msra.mxu0 0
        %608 = vmatprep.subr.bf16.mxu0 0
        %609 = vmatpush1.bf16.xpose.msra.mxu0 0
        %610 = vmatprep.subr.bf16.mxu0 0
        %611 = vmatpush1.bf16.xpose.msra.mxu0 0
        %612 = vmatprep.subr.bf16.mxu0 0
        %613 = vmatpush1.bf16.xpose.msra.mxu0 0
        %614 = vmatprep.subr.bf16.mxu0 0
        %615 = vmatpush1.bf16.xpose.msra.mxu0 0
        %616 = vmatprep.subr.bf16.mxu0 0
        %617 = vmatpush1.bf16.xpose.msra.mxu0 0
        %618 = vmatprep.subr.bf16.mxu0 0
        %619 = vmatpush1.bf16.xpose.msra.mxu0 0
        %620 = vmatprep.subr.bf16.mxu0 0
        %621 = vmatpush1.bf16.xpose.msra.mxu0 0
        %622 = vmatprep.subr.bf16.mxu0 0
        %623 = vmatpush1.bf16.xpose.msra.mxu0 0
        %624 = vmatprep.subr.bf16.mxu0 0
        %625 = vmatpush1.bf16.xpose.msra.mxu0 0
        %626 = vmatprep.subr.bf16.mxu0 0
        %627 = vmatpush1.bf16.xpose.msra.mxu0 0
        %628 = vmatprep.subr.bf16.mxu0 0
        %629 = vmatpush1.bf16.xpose.msra.mxu0 0
        %630 = vmatprep.subr.bf16.mxu0 0
        %631 = vmatpush1.bf16.xpose.msra.mxu0 0
        %632 = vmatprep.subr.bf16.mxu0 0
        %633 = vmatpush1.bf16.xpose.msra.mxu0 0
        %634 = vmatprep.subr.bf16.mxu0 0
        %635 = vmatpush1.bf16.xpose.msra.mxu0 0
        %636 = vmatprep.mubr.bf16.mxu0 0
        %637 = vmatmul.mubr.bf16.gmra.mrb[0].mxu0 %v599
        %v638 = vpop.f32.mrb[0].mxu0
        %v639 = vadd.f32 0.0, %v638
        %v640 = vpop.f32.mrb[0].mxu0
        %v641 = vpop.f32.mrb[0].mxu0
        %v642 = vpop.f32.mrb[0].mxu0
        %643 = vdwg.mxu0
        %s644 = scalar_lea.vmem [#allocation3], 16
        %v645 = vld [vmem:[%s644] sm:$0xff]
        %v646 = vsel %vm316, %v639, -inf
        %647 = vmax.xlane.f32.xlu0 %v646
        %v648 = vpop.xlane.xlu0 %647
        %v649 = vmax.f32 %v645, %v648
        %v650 = vsub.f32 %v645, %v649
        %v651 = vmul.f32 %v650, 1.442695
        %v652 = vpow.pop %v651
        %654 = vset.pattern.permute.xlu0 0
        %655 = vperm.xlu0 %654, %v649
        %v656 = vpop.permute.xlu0 %655
        %v658 = vsub.f32 %v639, %v656
        %v659 = vpack.c.bf16 %v658, %v658
        %v661 = vmul.bf16 %v659, 1069105081
        %v662 = vpow.bf16.pop %v661
        %s663 = scalar_lea.vmem [#allocation4], 16
        %v664 = vld [vmem:[%s663] sm:$0xff]
        %v665 = vmul.f32 %v652, %v664
        %v666 = vunpack.c.l.bf16 %v662
        %v667 = vsel %vm316, %v666, 0.0
        %668 = vadd.xlane.f32.xlu0 %v667
        %v669 = vpop.xlane.xlu0 %668
        %v670 = vadd.f32 %v665, %v669
        %671 = vst.msk [vmem:[%s663] sm:$0xff] %vm388, %v670
        %s672 = scalar_lea.vmem [#allocation5], 16
        %v673 = vld [vmem:[%s672] sm:$0xff]
        %675 = vset.pattern.permute.xlu0 0
        %676 = vperm.xlu0 %675, %v652
        %v677 = vpop.permute.xlu0 %676
        %v679 = vmul.f32 %v677, %v673
        %680 = vrot.lane.b32.xlu0 %v314, 112
        %v681 = vpop.permute.xlu0 %680
        %v683 = vsel %vm316, %v662, 0
        %v686 = vsel %vm400, %v681, 0
        %688 = vmatprep.subr.bf16.mxu0 0
        %689 = vmatpush1.bf16.msra.mxu0 %v686
        %690 = vmatprep.subr.bf16.mxu0 0
        %691 = vmatpush1.bf16.msra.mxu0 0
        %692 = vmatprep.subr.bf16.mxu0 0
        %693 = vmatpush1.bf16.msra.mxu0 0
        %694 = vmatprep.subr.bf16.mxu0 0
        %695 = vmatpush1.bf16.msra.mxu0 0
        %696 = vmatprep.subr.bf16.mxu0 0
        %697 = vmatpush1.bf16.msra.mxu0 0
        %698 = vmatprep.subr.bf16.mxu0 0
        %699 = vmatpush1.bf16.msra.mxu0 0
        %700 = vmatprep.subr.bf16.mxu0 0
        %701 = vmatpush1.bf16.msra.mxu0 0
        %702 = vmatprep.subr.bf16.mxu0 0
        %703 = vmatpush1.bf16.msra.mxu0 0
        %704 = vmatprep.subr.bf16.mxu0 0
        %705 = vmatpush1.bf16.msra.mxu0 0
        %706 = vmatprep.subr.bf16.mxu0 0
        %707 = vmatpush1.bf16.msra.mxu0 0
        %708 = vmatprep.subr.bf16.mxu0 0
        %709 = vmatpush1.bf16.msra.mxu0 0
        %710 = vmatprep.subr.bf16.mxu0 0
        %711 = vmatpush1.bf16.msra.mxu0 0
        %712 = vmatprep.subr.bf16.mxu0 0
        %713 = vmatpush1.bf16.msra.mxu0 0
        %714 = vmatprep.subr.bf16.mxu0 0
        %715 = vmatpush1.bf16.msra.mxu0 0
        %716 = vmatprep.subr.bf16.mxu0 0
        %717 = vmatpush1.bf16.msra.mxu0 0
        %718 = vmatprep.subr.bf16.mxu0 0
        %719 = vmatpush1.bf16.msra.mxu0 0
        %720 = vmatprep.mubr.bf16.mxu0 0
        %721 = vmatmul.mubr.bf16.gmra.mrb[0].mxu0 %v683
        %v722 = vpop.f32.mrb[0].mxu0
        %v723 = vadd.f32 0.0, %v722
        %v724 = vpop.f32.mrb[0].mxu0
        %v725 = vpop.f32.mrb[0].mxu0
        %v726 = vpop.f32.mrb[0].mxu0
        %727 = vdwg.mxu0
        %v728 = vadd.f32 %v679, %v723
        %729 = vst.msk [vmem:[%s672] sm:$0xff] %vm316, %v728
        %730 = vst.msk [vmem:[%s644] sm:$0xff] %vm388, %v649
        %v731 = vld [vmem:[#allocation2] sm:$0xf]
        %v733 = vunpack.c.l.b16 %v731
        %v734 = vpack.c.b16 %v733, %v733
        %735 = vrot.lane.b32.xlu0 %v734, 104
        %v736 = vpop.permute.xlu0 %735
        %737 = vrot.lane.b32.xlu0 %v312, 104
        %v738 = vpop.permute.xlu0 %737
        %v740 = vsel %vm316, %v736, 0
        %v743 = vsel %vm316, %v738, 0
        %745 = vmatprep.subr.bf16.mxu0 0
        %746 = vmatpush1.bf16.xpose.msra.mxu0 %v743
        %747 = vmatprep.subr.bf16.mxu0 0
        %748 = vmatpush1.bf16.xpose.msra.mxu0 0
        %749 = vmatprep.subr.bf16.mxu0 0
        %750 = vmatpush1.bf16.xpose.msra.mxu0 0
        %751 = vmatprep.subr.bf16.mxu0 0
        %752 = vmatpush1.bf16.xpose.msra.mxu0 0
        %753 = vmatprep.subr.bf16.mxu0 0
        %754 = vmatpush1.bf16.xpose.msra.mxu0 0
        %755 = vmatprep.subr.bf16.mxu0 0
        %756 = vmatpush1.bf16.xpose.msra.mxu0 0
        %757 = vmatprep.subr.bf16.mxu0 0
        %758 = vmatpush1.bf16.xpose.msra.mxu0 0
        %759 = vmatprep.subr.bf16.mxu0 0
        %760 = vmatpush1.bf16.xpose.msra.mxu0 0
        %761 = vmatprep.subr.bf16.mxu0 0
        %762 = vmatpush1.bf16.xpose.msra.mxu0 0
        %763 = vmatprep.subr.bf16.mxu0 0
        %764 = vmatpush1.bf16.xpose.msra.mxu0 0
        %765 = vmatprep.subr.bf16.mxu0 0
        %766 = vmatpush1.bf16.xpose.msra.mxu0 0
        %767 = vmatprep.subr.bf16.mxu0 0
        %768 = vmatpush1.bf16.xpose.msra.mxu0 0
        %769 = vmatprep.subr.bf16.mxu0 0
        %770 = vmatpush1.bf16.xpose.msra.mxu0 0
        %771 = vmatprep.subr.bf16.mxu0 0
        %772 = vmatpush1.bf16.xpose.msra.mxu0 0
        %773 = vmatprep.subr.bf16.mxu0 0
        %774 = vmatpush1.bf16.xpose.msra.mxu0 0
        %775 = vmatprep.subr.bf16.mxu0 0
        %776 = vmatpush1.bf16.xpose.msra.mxu0 0
        %777 = vmatprep.mubr.bf16.mxu0 0
        %778 = vmatmul.mubr.bf16.gmra.mrb[0].mxu0 %v740
        %v779 = vpop.f32.mrb[0].mxu0
        %v780 = vadd.f32 0.0, %v779
        %v781 = vpop.f32.mrb[0].mxu0
        %v782 = vpop.f32.mrb[0].mxu0
        %v783 = vpop.f32.mrb[0].mxu0
        %784 = vdwg.mxu0
        %s785 = scalar_lea.vmem [#allocation3], 24
        %v786 = vld [vmem:[%s785] sm:$0xff]
        %v787 = vsel %vm316, %v780, -inf
        %788 = vmax.xlane.f32.xlu0 %v787
        %v789 = vpop.xlane.xlu0 %788
        %v790 = vmax.f32 %v786, %v789
        %v791 = vsub.f32 %v786, %v790
        %v792 = vmul.f32 %v791, 1.442695
        %v793 = vpow.pop %v792
        %795 = vset.pattern.permute.xlu0 0
        %796 = vperm.xlu0 %795, %v790
        %v797 = vpop.permute.xlu0 %796
        %v799 = vsub.f32 %v780, %v797
        %v800 = vpack.c.bf16 %v799, %v799
        %v802 = vmul.bf16 %v800, 1069105081
        %v803 = vpow.bf16.pop %v802
        %s804 = scalar_lea.vmem [#allocation4], 24
        %v805 = vld [vmem:[%s804] sm:$0xff]
        %v806 = vmul.f32 %v793, %v805
        %v807 = vunpack.c.l.bf16 %v803
        %v808 = vsel %vm316, %v807, 0.0
        %809 = vadd.xlane.f32.xlu0 %v808
        %v810 = vpop.xlane.xlu0 %809
        %v811 = vadd.f32 %v806, %v810
        %812 = vst.msk [vmem:[%s804] sm:$0xff] %vm388, %v811
        %s813 = scalar_lea.vmem [#allocation5], 24
        %v814 = vld [vmem:[%s813] sm:$0xff]
        %816 = vset.pattern.permute.xlu0 0
        %817 = vperm.xlu0 %816, %v793
        %v818 = vpop.permute.xlu0 %817
        %v820 = vmul.f32 %v818, %v814
        %821 = vrot.lane.b32.xlu0 %v314, 104
        %v822 = vpop.permute.xlu0 %821
        %v824 = vsel %vm316, %v803, 0
        %v827 = vsel %vm400, %v822, 0
        %829 = vmatprep.subr.bf16.mxu0 0
        %830 = vmatpush1.bf16.msra.mxu0 %v827
        %831 = vmatprep.subr.bf16.mxu0 0
        %832 = vmatpush1.bf16.msra.mxu0 0
        %833 = vmatprep.subr.bf16.mxu0 0
        %834 = vmatpush1.bf16.msra.mxu0 0
        %835 = vmatprep.subr.bf16.mxu0 0
        %836 = vmatpush1.bf16.msra.mxu0 0
        %837 = vmatprep.subr.bf16.mxu0 0
        %838 = vmatpush1.bf16.msra.mxu0 0
        %839 = vmatprep.subr.bf16.mxu0 0
        %840 = vmatpush1.bf16.msra.mxu0 0
        %841 = vmatprep.subr.bf16.mxu0 0
        %842 = vmatpush1.bf16.msra.mxu0 0
        %843 = vmatprep.subr.bf16.mxu0 0
        %844 = vmatpush1.bf16.msra.mxu0 0
        %845 = vmatprep.subr.bf16.mxu0 0
        %846 = vmatpush1.bf16.msra.mxu0 0
        %847 = vmatprep.subr.bf16.mxu0 0
        %848 = vmatpush1.bf16.msra.mxu0 0
        %849 = vmatprep.subr.bf16.mxu0 0
        %850 = vmatpush1.bf16.msra.mxu0 0
        %851 = vmatprep.subr.bf16.mxu0 0
        %852 = vmatpush1.bf16.msra.mxu0 0
        %853 = vmatprep.subr.bf16.mxu0 0
        %854 = vmatpush1.bf16.msra.mxu0 0
        %855 = vmatprep.subr.bf16.mxu0 0
        %856 = vmatpush1.bf16.msra.mxu0 0
        %857 = vmatprep.subr.bf16.mxu0 0
        %858 = vmatpush1.bf16.msra.mxu0 0
        %859 = vmatprep.subr.bf16.mxu0 0
        %860 = vmatpush1.bf16.msra.mxu0 0
        %861 = vmatprep.mubr.bf16.mxu0 0
        %862 = vmatmul.mubr.bf16.gmra.mrb[0].mxu0 %v824
        %v863 = vpop.f32.mrb[0].mxu0
        %v864 = vadd.f32 0.0, %v863
        %v865 = vpop.f32.mrb[0].mxu0
        %v866 = vpop.f32.mrb[0].mxu0
        %v867 = vpop.f32.mrb[0].mxu0
        %868 = vdwg.mxu0
        %v869 = vadd.f32 %v820, %v864
        %870 = vst.msk [vmem:[%s813] sm:$0xff] %vm316, %v869
        %871 = vst.msk [vmem:[%s785] sm:$0xff] %vm388, %v790
        // Predicated region
        $region49: #{tpu_custom_call.1} parent=31 // pred_check
          %p872 = pneg %p288
        $region50: #{tpu_custom_call.1} parent=31 // pred_check_branch
          %874 = sbr.rel (%p872) target = $region52
        $region51: #{tpu_custom_call.1} parent=31 // pred_region
          %v875 = vld [vmem:[#allocation4] sm:$0xff]
          %v876 = vrcp.pop %v875
          %v877 = vld [vmem:[#allocation5] sm:$0xff]
          %879 = vset.pattern.permute.xlu0 0
          %880 = vperm.xlu0 %879, %v876
          %v881 = vpop.permute.xlu0 %880
          %v883 = vmul.f32 %v877, %v881
          %884 = vst.msk [vmem:[%s286] sm:$0xff] %vm316, %v883
          %v885 = vld [vmem:[%s521] sm:$0xff]
          %v886 = vrcp.pop %v885
          %v887 = vld [vmem:[%s530] sm:$0xff]
          %889 = vset.pattern.permute.xlu0 0
          %890 = vperm.xlu0 %889, %v886
          %v891 = vpop.permute.xlu0 %890
          %v893 = vmul.f32 %v887, %v891
          %895 = vrot.lane.b32.xlu0 %v893, 8
          %v896 = vpop.permute.xlu0 %895
          %vm898 = vcmask 130112
          %899 = vst.msk [vmem:[%s286] sm:$0xff] %vm898, %v896
          %v900 = vld [vmem:[%s663] sm:$0xff]
          %v901 = vrcp.pop %v900
          %v902 = vld [vmem:[%s672] sm:$0xff]
          %904 = vset.pattern.permute.xlu0 0
          %905 = vperm.xlu0 %904, %v901
          %v906 = vpop.permute.xlu0 %905
          %v908 = vmul.f32 %v902, %v906
          %910 = vrot.lane.b32.xlu0 %v908, 16
          %v911 = vpop.permute.xlu0 %910
          %vm913 = vcmask 195712
          %914 = vst.msk [vmem:[%s286] sm:$0xff] %vm913, %v911
          %v915 = vld [vmem:[%s804] sm:$0xff]
          %v916 = vrcp.pop %v915
          %v917 = vld [vmem:[%s813] sm:$0xff]
          %919 = vset.pattern.permute.xlu0 0
          %920 = vperm.xlu0 %919, %v916
          %v921 = vpop.permute.xlu0 %920
          %v923 = vmul.f32 %v917, %v921
          %925 = vrot.lane.b32.xlu0 %v923, 24
          %v926 = vpop.permute.xlu0 %925
          %vm928 = vcmask 261312
          %929 = vst.msk [vmem:[%s286] sm:$0xff] %vm928, %v926
        $region52: #{tpu_custom_call.1} parent=31 // pred_fallthru
          _
        %s930 = sand.u32 %s136, 1
        %s931 = scalar_lea.sflag [#allocation8], %s930
        %s932 = sand.u32 %s136, 1
        %s933 = smul.addr %s932, 8
        %s934 = scalar_lea.vmem [#allocation12], %s933
        // Predicated region
        $region53: #{tpu_custom_call.1} parent=31 // pred_check
          %p935 = pneg %p146
        $region54: #{tpu_custom_call.1} parent=31 // pred_check_branch
          %937 = sbr.rel (%p935) target = $region56
        $region55: #{tpu_custom_call.1} parent=31 // pred_region
          %s939 = ssub.s32 128, 128
          %940 = vsyncadd %s931, %s939
          %s941 = sadd.s32 %s29, %s28
          %s942 = smul.addr %s941, 128
          %s943 = scalar_lea.hbm %s3, %s942
          %s945 = sshll.u32 %s934, 4
          %s946 = int_to_ptr.vmem [resolvable:$true] %s945
          %948 = dma.vmem_to_hbm [thread:$0]  %s946, 128, %s943, %s931
        $region56: #{tpu_custom_call.1} parent=31 // pred_fallthru
          _
      $region32: #{tpu_custom_call.1} parent=5 // pred_fallthru
        _
      %p949 = scmp.le.s32.totalorder 2, %s18
      // Predicated region
      $region57: #{tpu_custom_call.1} parent=5 // pred_check
        %p950 = pneg %p949
      $region58: #{tpu_custom_call.1} parent=5 // pred_check_branch
        %952 = sbr.rel (%p950) target = $region60
      $region59: #{tpu_custom_call.1} parent=5 // pred_region
        %s953 = ssub.s32 %s18, 2
        // Predicated region
        $region61: #{tpu_custom_call.1} parent=59 // pred_check
          %p954 = pneg %p152
        $region62: #{tpu_custom_call.1} parent=59 // pred_check_branch
          %956 = sbr.rel (%p954) target = $region64
        $region63: #{tpu_custom_call.1} parent=59 // pred_region
          %s957 = sand.u32 %s137, 1
          %s958 = scalar_lea.sflag [#allocation8], %s957
          %s959 = sand.u32 %s137, 1
          %s960 = smul.addr %s959, 8
          %s961 = scalar_lea.vmem [#allocation12], %s960
          %962 = dma.done %s958, 128
        $region64: #{tpu_custom_call.1} parent=59 // pred_fallthru
          _
      $region60: #{tpu_custom_call.1} parent=5 // pred_fallthru
        _
    $region6: #{tpu_custom_call.1} parent=1 // loop_footer
      %s22 = sadd.s32 1, %s18
    $region7: #{tpu_custom_call.1} parent=1 // loop_footer_branch
      %17 = sbr.rel target = $region3
    $region8: #{tpu_custom_call.1} parent=1 // loop_exit
      _
    %963 = vsyncpa [#allocation7], 1
    %s964 = scalar_lea.sflag [#allocation7], 1
    %965 = vsyncpa %s964, 1
    %966 = vsyncpa [#allocation10], 1
    %s967 = scalar_lea.sflag [#allocation10], 1
    %968 = vsyncpa %s967, 1
    %969 = vsyncpa [#allocation8], 1
    %s970 = scalar_lea.sflag [#allocation8], 1
    %971 = vsyncpa %s970, 1

</llo_original>
